<compile_context>
chip_gen: v6e
topology: v6e:2x2x1
jax: 0.10.0
libtpu: 0.0.40
codegen_flags: <defaults>
</compile_context>

<pallas_src>
import functools

import jax
import jax.numpy as jnp
import numpy as np
from jax import lax
from jax.experimental import pallas as pl
from jax.experimental.pallas import tpu as pltpu

LANE = 128
SUBLANE = 8
NCORES = 2             # "parallel" grid split; uses both TCs on v7x, harmless on v5e/v6e
MAX_TILE_ROWS = 2048   # 2048*128*4 B = 1 MiB per operand block (x3 inputs x2 buffers)
CHUNK_ROWS = 32        # inner chunk: bounds live vregs (~45 < 64) & amortizes loop overhead


def _round_up(x, m):
    return ((x + m - 1) // m) * m


def _fold_rows(x):
    """Fold (C, LANE) -> (SUBLANE, LANE) with a pairwise add tree of static slices."""
    parts = [x[r:r + SUBLANE, :] for r in range(0, x.shape[0], SUBLANE)]
    while len(parts) > 1:
        nxt = [parts[j] + parts[j + 1] for j in range(0, len(parts) - 1, 2)]
        if len(parts) % 2:
            nxt.append(parts[-1])
        parts = nxt
    return parts[0]


def _ghmc_kernel(pred_ref, target_ref, lw_ref, part_ref, *,
                 bins, tile_rows, chunk_rows, total_rows, tiles_per_core):
    c = pl.program_id(0)
    i = pl.program_id(1)

    @pl.when(i == 0)
    def _init():
        part_ref[...] = jnp.zeros_like(part_ref)

    tile_idx = c * tiles_per_core + i            # un-clamped logical tile index
    rem = total_rows - tile_idx * tile_rows      # real-data rows left in this tile

    nchunks = tile_rows // chunk_rows
    # Exact f32 edges, same arithmetic as torch.arange(bins+1).float()/bins.
    edges = [np.float32(b) / np.float32(bins) for b in range(1, bins)]
    row_iota = lax.broadcasted_iota(jnp.int32, (chunk_rows, LANE), 0)   # hoisted

    def chunk_body(k, carry):
        lo = pl.multiple_of(k * chunk_rows, chunk_rows)
        pred = pred_ref[pl.ds(lo, chunk_rows), :].astype(jnp.float32)
        target = target_ref[pl.ds(lo, chunk_rows), :].astype(jnp.float32)
        lw = lw_ref[pl.ds(lo, chunk_rows), :].astype(jnp.float32)

        # Ragged-tail mask: rows at/after `total_rows` are DMA garbage.
        valid = (lw > 0.0) & (row_iota < (rem - lo))

        # Shared transcendental: t = exp(-|x|) feeds both sigmoid and log1p (EUP).
        t = jnp.exp(-jnp.abs(pred))
        inv = 1.0 / (1.0 + t)        # exact: keeps bin assignment bit-identical to ref
        sig = jnp.where(pred >= 0.0, inv, t * inv)
        g = jnp.abs(sig - target)
        # Stable BCE-with-logits: max(x,0) - x*z + log1p(exp(-|x|)).
        bce = jnp.maximum(pred, 0.0) - pred * target + jnp.log1p(t)

        gm = jnp.where(valid, g, -1.0)   # invalid/garbage never passes an edge test

        cnts = list(carry[:bins])
        sums = list(carry[bins:])
        # Cumulative masks: mask_b = valid & (g >= edges[b]);   mask_0 = valid.
        cnts[0] = cnts[0] + _fold_rows(jnp.where(valid, 1.0, 0.0))
        sums[0] = sums[0] + _fold_rows(jnp.where(valid, bce, 0.0))
        for b in range(1, bins):
            ge = gm >= edges[b - 1]
            cnts[b] = cnts[b] + _fold_rows(jnp.where(ge, 1.0, 0.0))
            sums[b] = sums[b] + _fold_rows(jnp.where(ge, bce, 0.0))
        return tuple(cnts) + tuple(sums)

    @pl.when(rem > 0)   # skip the padding grid points of the NCORES split entirely
    def _work():
        zero = jnp.zeros((SUBLANE, LANE), jnp.float32)
        res = lax.fori_loop(0, nchunks, chunk_body, (zero,) * (2 * bins))
        for b in range(2 * bins):
            part_ref[0, b, :, :] = part_ref[0, b, :, :] + res[b]


def ghmc_loss(pred, target, label_weight, *, bins=10, loss_weight=1.0):
    """Pallas GHMC loss (momentum = 0). pred/target/label_weight: same shape, any rank."""
    bins = int(bins)
    total = int(np.prod(pred.shape))
    rows = pl.cdiv(total, LANE)

    def to_slab(x):
        if not jnp.issubdtype(x.dtype, jnp.floating):
            x = x.astype(jnp.float32)
        flat = x.reshape(-1)
        if total % LANE:   # pad only when the flat size is not lane aligned
            flat = jnp.pad(flat, (0, rows * LANE - total), constant_values=0)
        return flat.reshape(rows, LANE)

    pred2 = to_slab(pred)
    target2 = to_slab(target)
    lw2 = to_slab(label_weight)   # zero padding => label_weight 0 => invalid

    tile_rows = min(MAX_TILE_ROWS, _round_up(rows, SUBLANE))
    chunk_rows = min(CHUNK_ROWS, tile_rows)
    tile_rows = _round_up(tile_rows, chunk_rows)
    num_tiles = pl.cdiv(rows, tile_rows)
    tiles_per_core = pl.cdiv(num_tiles, NCORES)

    kernel = functools.partial(
        _ghmc_kernel, bins=bins, tile_rows=tile_rows, chunk_rows=chunk_rows,
        total_rows=rows, tiles_per_core=tiles_per_core)

    def in_map(c, i):
        # Clamp so the padding grid points of the NCORES split never DMA out of
        # bounds (their compute is skipped in-kernel via `rem > 0`).
        return (jnp.minimum(c * tiles_per_core + i, num_tiles - 1), 0)

    bytes_in = sum(int(np.prod(a.shape)) * a.dtype.itemsize
                   for a in (pred2, target2, lw2))
    out_bytes = NCORES * 2 * bins * SUBLANE * LANE * 4
    cost = pl.CostEstimate(flops=70 * rows * LANE,
                           transcendentals=2 * rows * LANE,
                           bytes_accessed=bytes_in + out_bytes)

    parts = pl.pallas_call(
        kernel,
        out_shape=jax.ShapeDtypeStruct((NCORES, 2 * bins, SUBLANE, LANE), jnp.float32),
        grid=(NCORES, tiles_per_core),
        in_specs=[
            pl.BlockSpec((tile_rows, LANE), in_map),
            pl.BlockSpec((tile_rows, LANE), in_map),
            pl.BlockSpec((tile_rows, LANE), in_map),
        ],
        out_specs=pl.BlockSpec((1, 2 * bins, SUBLANE, LANE),
                               lambda c, i: (c, 0, 0, 0)),
        compiler_params=pltpu.CompilerParams(
            dimension_semantics=("parallel", "arbitrary"),
            vmem_limit_bytes=32 * 1024 * 1024,
        ),
        cost_estimate=cost,
    )(pred2, target2, lw2)

    # Tiny epilogue (~40 flops): merge per-core partials, difference the cumulative
    # per-bin (count, bce-sum), apply GHM weighting.  The reference's `tot` factor
    # cancels exactly: loss = loss_weight * (1/n) * sum_b S_b / N_b.
    cum = jnp.sum(parts, axis=(0, 2, 3))             # (2*bins,)
    cum_cnt, cum_sum = cum[:bins], cum[bins:]
    zero1 = jnp.zeros((1,), jnp.float32)
    cnt = cum_cnt - jnp.concatenate([cum_cnt[1:], zero1])
    s = cum_sum - jnp.concatenate([cum_sum[1:], zero1])
    has = cnt > 0.0
    n = jnp.sum(has.astype(jnp.float32))
    per_bin = jnp.where(has, s / jnp.maximum(cnt, 1.0), 0.0)
    loss = jnp.where(n > 0.0, jnp.sum(per_bin) / jnp.maximum(n, 1.0), 0.0)
    return loss * jnp.float32(loss_weight)


def ghmc_loss_ref(pred, target, label_weight, *, bins=10, loss_weight=1.0):
    """Pure-JAX reference mirroring the PyTorch forward (momentum = 0)."""
    pred = pred.reshape(-1).astype(jnp.float32)
    target = target.reshape(-1).astype(jnp.float32)
    lw = label_weight.reshape(-1).astype(jnp.float32)
    edges = jnp.arange(bins + 1, dtype=jnp.float32) / bins
    edges = edges.at[-1].add(1e-6)
    valid = lw > 0
    g = jnp.abs(jax.nn.sigmoid(pred) - target)
    tot = jnp.maximum(jnp.sum(valid.astype(jnp.float32)), 1.0)
    weights = jnp.zeros_like(pred)
    n = 0.0
    for i in range(bins):
        inds = (g >= edges[i]) & (g < edges[i + 1]) & valid
        num = jnp.sum(inds.astype(jnp.float32))
        has = num > 0
        w_i = jnp.where(has, tot / jnp.maximum(num, 1.0), 0.0)
        weights = jnp.where(inds, w_i, weights)
        n = n + jnp.where(has, 1.0, 0.0)
    weights = jnp.where(n > 0, weights / jnp.maximum(n, 1.0), weights)
    bce = jnp.maximum(pred, 0.0) - pred * target + jnp.log1p(jnp.exp(-jnp.abs(pred)))
    return jnp.sum(weights * bce) / tot * loss_weight


if __name__ == "__main__":
    key = jax.random.PRNGKey(0)
    k1, k2, k3 = jax.random.split(key, 3)

    # pred: logits from a classification head, shape (B, C, H, W) = (2, 4, 16, 16)
    shape = (2, 4, 16, 16)
    pred = jax.random.normal(k1, shape, dtype=jnp.float32) * 2.0
    target = jax.random.bernoulli(k2, 0.5, shape).astype(jnp.float32)
    # ~80% of positions are valid
    label_weight = jax.random.bernoulli(k3, 0.8, shape).astype(jnp.float32)

    loss = ghmc_loss(pred, target, label_weight, bins=10, loss_weight=1.0)
    loss = jax.block_until_ready(loss)

    ref = jax.block_until_ready(
        ghmc_loss_ref(pred, target, label_weight, bins=10, loss_weight=1.0))

    np.testing.assert_allclose(np.asarray(loss), np.asarray(ref), rtol=1e-2, atol=1e-4)
    print("KERNEL_OK")
</pallas_src>

<mosaic_0001>
module attributes {stable_mosaic.version = 11 : i64} {
  func.func @_ghmc_kernel(%arg0: i32, %arg1: i32, %arg2: memref<16x128xf32, #tpu.memory_space<vmem>>, %arg3: memref<16x128xf32, #tpu.memory_space<vmem>>, %arg4: memref<16x128xf32, #tpu.memory_space<vmem>>, %arg5: memref<1x20x8x128xf32, #tpu.memory_space<vmem>>) attributes {dimension_semantics = [#tpu.dimension_semantics<parallel>, #tpu.dimension_semantics<arbitrary>], iteration_bounds = array<i64: 2, 1>, scalar_prefetch = 0 : i64, scratch_operands = 0 : i64, tpu.core_type = #tpu.core_type<tc>, window_params = [{transform_indices = @transform_0, window_bounds = array<i64: 16, 128>}, {transform_indices = @transform_1, window_bounds = array<i64: 16, 128>}, {transform_indices = @transform_2, window_bounds = array<i64: 16, 128>}, {transform_indices = @transform_3, window_bounds = array<i64: 1, 20, 8, 128>}]} {
    %c0_i32 = arith.constant 0 : i32
    %0 = arith.cmpi eq, %arg1, %c0_i32 : i32
    %1 = arith.extui %0 : i1 to i32
    %c0_i32_0 = arith.constant 0 : i32
    %2 = arith.cmpi ne, %1, %c0_i32_0 : i32
    scf.if %2 {
      %cst = arith.constant 0.000000e+00 : f32
      %11 = vector.broadcast %cst : f32 to vector<1x20x8x128xf32>
      %c0 = arith.constant 0 : index
      %c0_4 = arith.constant 0 : index
      %c0_5 = arith.constant 0 : index
      %c0_6 = arith.constant 0 : index
      %12 = vector.load %arg5[%c0, %c0_4, %c0_5, %c0_6] : memref<1x20x8x128xf32, #tpu.memory_space<vmem>>, vector<1x20x8x128xf32>
      tpu.vector_store %arg5[%c0, %c0_4, %c0_5, %c0_6], %11 {strides = array<i32>} : memref<1x20x8x128xf32, #tpu.memory_space<vmem>>, vector<1x20x8x128xf32>,
    } else {
    }
    %c1_i32 = arith.constant 1 : i32
    %3 = arith.muli %arg0, %c1_i32 : i32
    %4 = arith.addi %3, %arg1 : i32
    %c16_i32 = arith.constant 16 : i32
    %5 = arith.muli %4, %c16_i32 : i32
    %c16_i32_1 = arith.constant 16 : i32
    %6 = arith.subi %c16_i32_1, %5 : i32
    %7 = tpu.iota {dimensions = array<i32: 0>} : vector<16x128xi32>
    %c0_i32_2 = arith.constant 0 : i32
    %8 = arith.cmpi sgt, %6, %c0_i32_2 : i32
    %9 = arith.extui %8 : i1 to i32
    %c0_i32_3 = arith.constant 0 : i32
    %10 = arith.cmpi ne, %9, %c0_i32_3 : i32
    scf.if %10 {
      %cst = arith.constant 0.000000e+00 : f32
      %11 = vector.broadcast %cst : f32 to vector<8x128xf32>
      %c0_i32_4 = arith.constant 0 : i32
      %c16_i32_5 = arith.constant 16 : i32
      %12 = arith.muli %c0_i32_4, %c16_i32_5 : i32
      %13 = tpu.assume_multiple %12, 16 : i32
      %14 = arith.index_cast %13 : i32 to index
      %c0 = arith.constant 0 : index
      %15 = vector.load %arg2[%14, %c0] : memref<16x128xf32, #tpu.memory_space<vmem>>, vector<16x128xf32>
      %16 = arith.index_cast %13 : i32 to index
      %c0_6 = arith.constant 0 : index
      %17 = vector.load %arg3[%16, %c0_6] : memref<16x128xf32, #tpu.memory_space<vmem>>, vector<16x128xf32>
      %18 = arith.index_cast %13 : i32 to index
      %c0_7 = arith.constant 0 : index
      %19 = vector.load %arg4[%18, %c0_7] : memref<16x128xf32, #tpu.memory_space<vmem>>, vector<16x128xf32>
      %cst_8 = arith.constant 0.000000e+00 : f32
      %20 = vector.broadcast %cst_8 : f32 to vector<16x128xf32>
      %21 = arith.cmpf ogt, %19, %20 : vector<16x128xf32>
      %22 = arith.subi %6, %13 : i32
      %23 = vector.broadcast %22 : i32 to vector<16x128xi32>
      %24 = arith.cmpi slt, %7, %23 : vector<16x128xi32>
      %25 = arith.andi %21, %24 : vector<16x128xi1>
      %26 = math.absf %15 : vector<16x128xf32>
      %cst_9 = arith.constant 0.000000e+00 : f32
      %27 = vector.broadcast %cst_9 : f32 to vector<16x128xf32>
      %28 = arith.subf %27, %26 : vector<16x128xf32>
      %29 = math.exp %28 : vector<16x128xf32>
      %cst_10 = arith.constant 1.000000e+00 : f32
      %30 = vector.broadcast %cst_10 : f32 to vector<16x128xf32>
      %31 = arith.addf %30, %29 : vector<16x128xf32>
      %cst_11 = arith.constant 1.000000e+00 : f32
      %32 = vector.broadcast %cst_11 : f32 to vector<16x128xf32>
      %33 = arith.divf %32, %31 : vector<16x128xf32>
      %cst_12 = arith.constant 0.000000e+00 : f32
      %34 = vector.broadcast %cst_12 : f32 to vector<16x128xf32>
      %35 = arith.cmpf oge, %15, %34 : vector<16x128xf32>
      %36 = arith.mulf %29, %33 : vector<16x128xf32>
      %37 = arith.select %35, %33, %36 : vector<16x128xi1>, vector<16x128xf32>
      %38 = arith.subf %37, %17 : vector<16x128xf32>
      %39 = math.absf %38 : vector<16x128xf32>
      %cst_13 = arith.constant 0.000000e+00 : f32
      %40 = vector.broadcast %cst_13 : f32 to vector<16x128xf32>
      %41 = arith.maximumf %15, %40 : vector<16x128xf32>
      %42 = arith.mulf %15, %17 : vector<16x128xf32>
      %43 = arith.subf %41, %42 : vector<16x128xf32>
      %44 = math.log1p %29 : vector<16x128xf32>
      %45 = arith.addf %43, %44 : vector<16x128xf32>
      %cst_14 = arith.constant -1.000000e+00 : f32
      %46 = vector.broadcast %cst_14 : f32 to vector<16x128xf32>
      %47 = arith.select %25, %39, %46 : vector<16x128xi1>, vector<16x128xf32>
      %cst_15 = arith.constant 1.000000e+00 : f32
      %cst_16 = arith.constant 0.000000e+00 : f32
      %48 = vector.broadcast %cst_15 : f32 to vector<16x128xf32>
      %49 = vector.broadcast %cst_16 : f32 to vector<16x128xf32>
      %50 = arith.select %25, %48, %49 : vector<16x128xi1>, vector<16x128xf32>
      %51 = vector.extract_strided_slice %50 {offsets = [0, 0], sizes = [8, 128], strides = [1, 1]} : vector<16x128xf32> to vector<8x128xf32>
      %52 = vector.extract_strided_slice %50 {offsets = [8, 0], sizes = [8, 128], strides = [1, 1]} : vector<16x128xf32> to vector<8x128xf32>
      %53 = arith.addf %51, %52 : vector<8x128xf32>
      %54 = arith.addf %11, %53 : vector<8x128xf32>
      %cst_17 = arith.constant 0.000000e+00 : f32
      %55 = vector.broadcast %cst_17 : f32 to vector<16x128xf32>
      %56 = arith.select %25, %45, %55 : vector<16x128xi1>, vector<16x128xf32>
      %57 = vector.extract_strided_slice %56 {offsets = [0, 0], sizes = [8, 128], strides = [1, 1]} : vector<16x128xf32> to vector<8x128xf32>
      %58 = vector.extract_strided_slice %56 {offsets = [8, 0], sizes = [8, 128], strides = [1, 1]} : vector<16x128xf32> to vector<8x128xf32>
      %59 = arith.addf %57, %58 : vector<8x128xf32>
      %60 = arith.addf %11, %59 : vector<8x128xf32>
      %cst_18 = arith.constant 1.000000e-01 : f32
      %61 = vector.broadcast %cst_18 : f32 to vector<16x128xf32>
      %62 = arith.cmpf oge, %47, %61 : vector<16x128xf32>
      %cst_19 = arith.constant 1.000000e+00 : f32
      %cst_20 = arith.constant 0.000000e+00 : f32
      %63 = vector.broadcast %cst_19 : f32 to vector<16x128xf32>
      %64 = vector.broadcast %cst_20 : f32 to vector<16x128xf32>
      %65 = arith.select %62, %63, %64 : vector<16x128xi1>, vector<16x128xf32>
      %66 = vector.extract_strided_slice %65 {offsets = [0, 0], sizes = [8, 128], strides = [1, 1]} : vector<16x128xf32> to vector<8x128xf32>
      %67 = vector.extract_strided_slice %65 {offsets = [8, 0], sizes = [8, 128], strides = [1, 1]} : vector<16x128xf32> to vector<8x128xf32>
      %68 = arith.addf %66, %67 : vector<8x128xf32>
      %69 = arith.addf %11, %68 : vector<8x128xf32>
      %cst_21 = arith.constant 0.000000e+00 : f32
      %70 = vector.broadcast %cst_21 : f32 to vector<16x128xf32>
      %71 = arith.select %62, %45, %70 : vector<16x128xi1>, vector<16x128xf32>
      %72 = vector.extract_strided_slice %71 {offsets = [0, 0], sizes = [8, 128], strides = [1, 1]} : vector<16x128xf32> to vector<8x128xf32>
      %73 = vector.extract_strided_slice %71 {offsets = [8, 0], sizes = [8, 128], strides = [1, 1]} : vector<16x128xf32> to vector<8x128xf32>
      %74 = arith.addf %72, %73 : vector<8x128xf32>
      %75 = arith.addf %11, %74 : vector<8x128xf32>
      %cst_22 = arith.constant 2.000000e-01 : f32
      %76 = vector.broadcast %cst_22 : f32 to vector<16x128xf32>
      %77 = arith.cmpf oge, %47, %76 : vector<16x128xf32>
      %cst_23 = arith.constant 1.000000e+00 : f32
      %cst_24 = arith.constant 0.000000e+00 : f32
      %78 = vector.broadcast %cst_23 : f32 to vector<16x128xf32>
      %79 = vector.broadcast %cst_24 : f32 to vector<16x128xf32>
      %80 = arith.select %77, %78, %79 : vector<16x128xi1>, vector<16x128xf32>
      %81 = vector.extract_strided_slice %80 {offsets = [0, 0], sizes = [8, 128], strides = [1, 1]} : vector<16x128xf32> to vector<8x128xf32>
      %82 = vector.extract_strided_slice %80 {offsets = [8, 0], sizes = [8, 128], strides = [1, 1]} : vector<16x128xf32> to vector<8x128xf32>
      %83 = arith.addf %81, %82 : vector<8x128xf32>
      %84 = arith.addf %11, %83 : vector<8x128xf32>
      %cst_25 = arith.constant 0.000000e+00 : f32
      %85 = vector.broadcast %cst_25 : f32 to vector<16x128xf32>
      %86 = arith.select %77, %45, %85 : vector<16x128xi1>, vector<16x128xf32>
      %87 = vector.extract_strided_slice %86 {offsets = [0, 0], sizes = [8, 128], strides = [1, 1]} : vector<16x128xf32> to vector<8x128xf32>
      %88 = vector.extract_strided_slice %86 {offsets = [8, 0], sizes = [8, 128], strides = [1, 1]} : vector<16x128xf32> to vector<8x128xf32>
      %89 = arith.addf %87, %88 : vector<8x128xf32>
      %90 = arith.addf %11, %89 : vector<8x128xf32>
      %cst_26 = arith.constant 3.000000e-01 : f32
      %91 = vector.broadcast %cst_26 : f32 to vector<16x128xf32>
      %92 = arith.cmpf oge, %47, %91 : vector<16x128xf32>
      %cst_27 = arith.constant 1.000000e+00 : f32
      %cst_28 = arith.constant 0.000000e+00 : f32
      %93 = vector.broadcast %cst_27 : f32 to vector<16x128xf32>
      %94 = vector.broadcast %cst_28 : f32 to vector<16x128xf32>
      %95 = arith.select %92, %93, %94 : vector<16x128xi1>, vector<16x128xf32>
      %96 = vector.extract_strided_slice %95 {offsets = [0, 0], sizes = [8, 128], strides = [1, 1]} : vector<16x128xf32> to vector<8x128xf32>
      %97 = vector.extract_strided_slice %95 {offsets = [8, 0], sizes = [8, 128], strides = [1, 1]} : vector<16x128xf32> to vector<8x128xf32>
      %98 = arith.addf %96, %97 : vector<8x128xf32>
      %99 = arith.addf %11, %98 : vector<8x128xf32>
      %cst_29 = arith.constant 0.000000e+00 : f32
      %100 = vector.broadcast %cst_29 : f32 to vector<16x128xf32>
      %101 = arith.select %92, %45, %100 : vector<16x128xi1>, vector<16x128xf32>
      %102 = vector.extract_strided_slice %101 {offsets = [0, 0], sizes = [8, 128], strides = [1, 1]} : vector<16x128xf32> to vector<8x128xf32>
      %103 = vector.extract_strided_slice %101 {offsets = [8, 0], sizes = [8, 128], strides = [1, 1]} : vector<16x128xf32> to vector<8x128xf32>
      %104 = arith.addf %102, %103 : vector<8x128xf32>
      %105 = arith.addf %11, %104 : vector<8x128xf32>
      %cst_30 = arith.constant 4.000000e-01 : f32
      %106 = vector.broadcast %cst_30 : f32 to vector<16x128xf32>
      %107 = arith.cmpf oge, %47, %106 : vector<16x128xf32>
      %cst_31 = arith.constant 1.000000e+00 : f32
      %cst_32 = arith.constant 0.000000e+00 : f32
      %108 = vector.broadcast %cst_31 : f32 to vector<16x128xf32>
      %109 = vector.broadcast %cst_32 : f32 to vector<16x128xf32>
      %110 = arith.select %107, %108, %109 : vector<16x128xi1>, vector<16x128xf32>
      %111 = vector.extract_strided_slice %110 {offsets = [0, 0], sizes = [8, 128], strides = [1, 1]} : vector<16x128xf32> to vector<8x128xf32>
      %112 = vector.extract_strided_slice %110 {offsets = [8, 0], sizes = [8, 128], strides = [1, 1]} : vector<16x128xf32> to vector<8x128xf32>
      %113 = arith.addf %111, %112 : vector<8x128xf32>
      %114 = arith.addf %11, %113 : vector<8x128xf32>
      %cst_33 = arith.constant 0.000000e+00 : f32
      %115 = vector.broadcast %cst_33 : f32 to vector<16x128xf32>
      %116 = arith.select %107, %45, %115 : vector<16x128xi1>, vector<16x128xf32>
      %117 = vector.extract_strided_slice %116 {offsets = [0, 0], sizes = [8, 128], strides = [1, 1]} : vector<16x128xf32> to vector<8x128xf32>
      %118 = vector.extract_strided_slice %116 {offsets = [8, 0], sizes = [8, 128], strides = [1, 1]} : vector<16x128xf32> to vector<8x128xf32>
      %119 = arith.addf %117, %118 : vector<8x128xf32>
      %120 = arith.addf %11, %119 : vector<8x128xf32>
      %cst_34 = arith.constant 5.000000e-01 : f32
      %121 = vector.broadcast %cst_34 : f32 to vector<16x128xf32>
      %122 = arith.cmpf oge, %47, %121 : vector<16x128xf32>
      %cst_35 = arith.constant 1.000000e+00 : f32
      %cst_36 = arith.constant 0.000000e+00 : f32
      %123 = vector.broadcast %cst_35 : f32 to vector<16x128xf32>
      %124 = vector.broadcast %cst_36 : f32 to vector<16x128xf32>
      %125 = arith.select %122, %123, %124 : vector<16x128xi1>, vector<16x128xf32>
      %126 = vector.extract_strided_slice %125 {offsets = [0, 0], sizes = [8, 128], strides = [1, 1]} : vector<16x128xf32> to vector<8x128xf32>
      %127 = vector.extract_strided_slice %125 {offsets = [8, 0], sizes = [8, 128], strides = [1, 1]} : vector<16x128xf32> to vector<8x128xf32>
      %128 = arith.addf %126, %127 : vector<8x128xf32>
      %129 = arith.addf %11, %128 : vector<8x128xf32>
      %cst_37 = arith.constant 0.000000e+00 : f32
      %130 = vector.broadcast %cst_37 : f32 to vector<16x128xf32>
      %131 = arith.select %122, %45, %130 : vector<16x128xi1>, vector<16x128xf32>
      %132 = vector.extract_strided_slice %131 {offsets = [0, 0], sizes = [8, 128], strides = [1, 1]} : vector<16x128xf32> to vector<8x128xf32>
      %133 = vector.extract_strided_slice %131 {offsets = [8, 0], sizes = [8, 128], strides = [1, 1]} : vector<16x128xf32> to vector<8x128xf32>
      %134 = arith.addf %132, %133 : vector<8x128xf32>
      %135 = arith.addf %11, %134 : vector<8x128xf32>
      %cst_38 = arith.constant 6.000000e-01 : f32
      %136 = vector.broadcast %cst_38 : f32 to vector<16x128xf32>
      %137 = arith.cmpf oge, %47, %136 : vector<16x128xf32>
      %cst_39 = arith.constant 1.000000e+00 : f32
      %cst_40 = arith.constant 0.000000e+00 : f32
      %138 = vector.broadcast %cst_39 : f32 to vector<16x128xf32>
      %139 = vector.broadcast %cst_40 : f32 to vector<16x128xf32>
      %140 = arith.select %137, %138, %139 : vector<16x128xi1>, vector<16x128xf32>
      %141 = vector.extract_strided_slice %140 {offsets = [0, 0], sizes = [8, 128], strides = [1, 1]} : vector<16x128xf32> to vector<8x128xf32>
      %142 = vector.extract_strided_slice %140 {offsets = [8, 0], sizes = [8, 128], strides = [1, 1]} : vector<16x128xf32> to vector<8x128xf32>
      %143 = arith.addf %141, %142 : vector<8x128xf32>
      %144 = arith.addf %11, %143 : vector<8x128xf32>
      %cst_41 = arith.constant 0.000000e+00 : f32
      %145 = vector.broadcast %cst_41 : f32 to vector<16x128xf32>
      %146 = arith.select %137, %45, %145 : vector<16x128xi1>, vector<16x128xf32>
      %147 = vector.extract_strided_slice %146 {offsets = [0, 0], sizes = [8, 128], strides = [1, 1]} : vector<16x128xf32> to vector<8x128xf32>
      %148 = vector.extract_strided_slice %146 {offsets = [8, 0], sizes = [8, 128], strides = [1, 1]} : vector<16x128xf32> to vector<8x128xf32>
      %149 = arith.addf %147, %148 : vector<8x128xf32>
      %150 = arith.addf %11, %149 : vector<8x128xf32>
      %cst_42 = arith.constant 0.699999988 : f32
      %151 = vector.broadcast %cst_42 : f32 to vector<16x128xf32>
      %152 = arith.cmpf oge, %47, %151 : vector<16x128xf32>
      %cst_43 = arith.constant 1.000000e+00 : f32
      %cst_44 = arith.constant 0.000000e+00 : f32
      %153 = vector.broadcast %cst_43 : f32 to vector<16x128xf32>
      %154 = vector.broadcast %cst_44 : f32 to vector<16x128xf32>
      %155 = arith.select %152, %153, %154 : vector<16x128xi1>, vector<16x128xf32>
      %156 = vector.extract_strided_slice %155 {offsets = [0, 0], sizes = [8, 128], strides = [1, 1]} : vector<16x128xf32> to vector<8x128xf32>
      %157 = vector.extract_strided_slice %155 {offsets = [8, 0], sizes = [8, 128], strides = [1, 1]} : vector<16x128xf32> to vector<8x128xf32>
      %158 = arith.addf %156, %157 : vector<8x128xf32>
      %159 = arith.addf %11, %158 : vector<8x128xf32>
      %cst_45 = arith.constant 0.000000e+00 : f32
      %160 = vector.broadcast %cst_45 : f32 to vector<16x128xf32>
      %161 = arith.select %152, %45, %160 : vector<16x128xi1>, vector<16x128xf32>
      %162 = vector.extract_strided_slice %161 {offsets = [0, 0], sizes = [8, 128], strides = [1, 1]} : vector<16x128xf32> to vector<8x128xf32>
      %163 = vector.extract_strided_slice %161 {offsets = [8, 0], sizes = [8, 128], strides = [1, 1]} : vector<16x128xf32> to vector<8x128xf32>
      %164 = arith.addf %162, %163 : vector<8x128xf32>
      %165 = arith.addf %11, %164 : vector<8x128xf32>
      %cst_46 = arith.constant 8.000000e-01 : f32
      %166 = vector.broadcast %cst_46 : f32 to vector<16x128xf32>
      %167 = arith.cmpf oge, %47, %166 : vector<16x128xf32>
      %cst_47 = arith.constant 1.000000e+00 : f32
      %cst_48 = arith.constant 0.000000e+00 : f32
      %168 = vector.broadcast %cst_47 : f32 to vector<16x128xf32>
      %169 = vector.broadcast %cst_48 : f32 to vector<16x128xf32>
      %170 = arith.select %167, %168, %169 : vector<16x128xi1>, vector<16x128xf32>
      %171 = vector.extract_strided_slice %170 {offsets = [0, 0], sizes = [8, 128], strides = [1, 1]} : vector<16x128xf32> to vector<8x128xf32>
      %172 = vector.extract_strided_slice %170 {offsets = [8, 0], sizes = [8, 128], strides = [1, 1]} : vector<16x128xf32> to vector<8x128xf32>
      %173 = arith.addf %171, %172 : vector<8x128xf32>
      %174 = arith.addf %11, %173 : vector<8x128xf32>
      %cst_49 = arith.constant 0.000000e+00 : f32
      %175 = vector.broadcast %cst_49 : f32 to vector<16x128xf32>
      %176 = arith.select %167, %45, %175 : vector<16x128xi1>, vector<16x128xf32>
      %177 = vector.extract_strided_slice %176 {offsets = [0, 0], sizes = [8, 128], strides = [1, 1]} : vector<16x128xf32> to vector<8x128xf32>
      %178 = vector.extract_strided_slice %176 {offsets = [8, 0], sizes = [8, 128], strides = [1, 1]} : vector<16x128xf32> to vector<8x128xf32>
      %179 = arith.addf %177, %178 : vector<8x128xf32>
      %180 = arith.addf %11, %179 : vector<8x128xf32>
      %cst_50 = arith.constant 0.899999976 : f32
      %181 = vector.broadcast %cst_50 : f32 to vector<16x128xf32>
      %182 = arith.cmpf oge, %47, %181 : vector<16x128xf32>
      %cst_51 = arith.constant 1.000000e+00 : f32
      %cst_52 = arith.constant 0.000000e+00 : f32
      %183 = vector.broadcast %cst_51 : f32 to vector<16x128xf32>
      %184 = vector.broadcast %cst_52 : f32 to vector<16x128xf32>
      %185 = arith.select %182, %183, %184 : vector<16x128xi1>, vector<16x128xf32>
      %186 = vector.extract_strided_slice %185 {offsets = [0, 0], sizes = [8, 128], strides = [1, 1]} : vector<16x128xf32> to vector<8x128xf32>
      %187 = vector.extract_strided_slice %185 {offsets = [8, 0], sizes = [8, 128], strides = [1, 1]} : vector<16x128xf32> to vector<8x128xf32>
      %188 = arith.addf %186, %187 : vector<8x128xf32>
      %189 = arith.addf %11, %188 : vector<8x128xf32>
      %cst_53 = arith.constant 0.000000e+00 : f32
      %190 = vector.broadcast %cst_53 : f32 to vector<16x128xf32>
      %191 = arith.select %182, %45, %190 : vector<16x128xi1>, vector<16x128xf32>
      %192 = vector.extract_strided_slice %191 {offsets = [0, 0], sizes = [8, 128], strides = [1, 1]} : vector<16x128xf32> to vector<8x128xf32>
      %193 = vector.extract_strided_slice %191 {offsets = [8, 0], sizes = [8, 128], strides = [1, 1]} : vector<16x128xf32> to vector<8x128xf32>
      %194 = arith.addf %192, %193 : vector<8x128xf32>
      %195 = arith.addf %11, %194 : vector<8x128xf32>
      %c1_i32_54 = arith.constant 1 : i32
      %c0_55 = arith.constant 0 : index
      %c0_56 = arith.constant 0 : index
      %c0_57 = arith.constant 0 : index
      %c0_58 = arith.constant 0 : index
      %196 = vector.load %arg5[%c0_55, %c0_56, %c0_57, %c0_58] : memref<1x20x8x128xf32, #tpu.memory_space<vmem>>, vector<1x1x8x128xf32>
      %197 = vector.shape_cast %196 : vector<1x1x8x128xf32> to vector<8x128xf32>
      %198 = arith.addf %197, %54 : vector<8x128xf32>
      %c0_59 = arith.constant 0 : index
      %c0_60 = arith.constant 0 : index
      %c0_61 = arith.constant 0 : index
      %c0_62 = arith.constant 0 : index
      %199 = vector.load %arg5[%c0_59, %c0_60, %c0_61, %c0_62] : memref<1x20x8x128xf32, #tpu.memory_space<vmem>>, vector<1x1x8x128xf32>
      %200 = vector.shape_cast %199 : vector<1x1x8x128xf32> to vector<8x128xf32>
      %201 = vector.shape_cast %198 : vector<8x128xf32> to vector<1x1x8x128xf32>
      tpu.vector_store %arg5[%c0_59, %c0_60, %c0_61, %c0_62], %201 {strides = array<i32>} : memref<1x20x8x128xf32, #tpu.memory_space<vmem>>, vector<1x1x8x128xf32>,
      %c0_63 = arith.constant 0 : index
      %c1 = arith.constant 1 : index
      %c0_64 = arith.constant 0 : index
      %c0_65 = arith.constant 0 : index
      %202 = vector.load %arg5[%c0_63, %c1, %c0_64, %c0_65] : memref<1x20x8x128xf32, #tpu.memory_space<vmem>>, vector<1x1x8x128xf32>
      %203 = vector.shape_cast %202 : vector<1x1x8x128xf32> to vector<8x128xf32>
      %204 = arith.addf %203, %69 : vector<8x128xf32>
      %c0_66 = arith.constant 0 : index
      %c1_67 = arith.constant 1 : index
      %c0_68 = arith.constant 0 : index
      %c0_69 = arith.constant 0 : index
      %205 = vector.load %arg5[%c0_66, %c1_67, %c0_68, %c0_69] : memref<1x20x8x128xf32, #tpu.memory_space<vmem>>, vector<1x1x8x128xf32>
      %206 = vector.shape_cast %205 : vector<1x1x8x128xf32> to vector<8x128xf32>
      %207 = vector.shape_cast %204 : vector<8x128xf32> to vector<1x1x8x128xf32>
      tpu.vector_store %arg5[%c0_66, %c1_67, %c0_68, %c0_69], %207 {strides = array<i32>} : memref<1x20x8x128xf32, #tpu.memory_space<vmem>>, vector<1x1x8x128xf32>,
      %c0_70 = arith.constant 0 : index
      %c2 = arith.constant 2 : index
      %c0_71 = arith.constant 0 : index
      %c0_72 = arith.constant 0 : index
      %208 = vector.load %arg5[%c0_70, %c2, %c0_71, %c0_72] : memref<1x20x8x128xf32, #tpu.memory_space<vmem>>, vector<1x1x8x128xf32>
      %209 = vector.shape_cast %208 : vector<1x1x8x128xf32> to vector<8x128xf32>
      %210 = arith.addf %209, %84 : vector<8x128xf32>
      %c0_73 = arith.constant 0 : index
      %c2_74 = arith.constant 2 : index
      %c0_75 = arith.constant 0 : index
      %c0_76 = arith.constant 0 : index
      %211 = vector.load %arg5[%c0_73, %c2_74, %c0_75, %c0_76] : memref<1x20x8x128xf32, #tpu.memory_space<vmem>>, vector<1x1x8x128xf32>
      %212 = vector.shape_cast %211 : vector<1x1x8x128xf32> to vector<8x128xf32>
      %213 = vector.shape_cast %210 : vector<8x128xf32> to vector<1x1x8x128xf32>
      tpu.vector_store %arg5[%c0_73, %c2_74, %c0_75, %c0_76], %213 {strides = array<i32>} : memref<1x20x8x128xf32, #tpu.memory_space<vmem>>, vector<1x1x8x128xf32>,
      %c0_77 = arith.constant 0 : index
      %c3 = arith.constant 3 : index
      %c0_78 = arith.constant 0 : index
      %c0_79 = arith.constant 0 : index
      %214 = vector.load %arg5[%c0_77, %c3, %c0_78, %c0_79] : memref<1x20x8x128xf32, #tpu.memory_space<vmem>>, vector<1x1x8x128xf32>
      %215 = vector.shape_cast %214 : vector<1x1x8x128xf32> to vector<8x128xf32>
      %216 = arith.addf %215, %99 : vector<8x128xf32>
      %c0_80 = arith.constant 0 : index
      %c3_81 = arith.constant 3 : index
      %c0_82 = arith.constant 0 : index
      %c0_83 = arith.constant 0 : index
      %217 = vector.load %arg5[%c0_80, %c3_81, %c0_82, %c0_83] : memref<1x20x8x128xf32, #tpu.memory_space<vmem>>, vector<1x1x8x128xf32>
      %218 = vector.shape_cast %217 : vector<1x1x8x128xf32> to vector<8x128xf32>
      %219 = vector.shape_cast %216 : vector<8x128xf32> to vector<1x1x8x128xf32>
      tpu.vector_store %arg5[%c0_80, %c3_81, %c0_82, %c0_83], %219 {strides = array<i32>} : memref<1x20x8x128xf32, #tpu.memory_space<vmem>>, vector<1x1x8x128xf32>,
      %c0_84 = arith.constant 0 : index
      %c4 = arith.constant 4 : index
      %c0_85 = arith.constant 0 : index
      %c0_86 = arith.constant 0 : index
      %220 = vector.load %arg5[%c0_84, %c4, %c0_85, %c0_86] : memref<1x20x8x128xf32, #tpu.memory_space<vmem>>, vector<1x1x8x128xf32>
      %221 = vector.shape_cast %220 : vector<1x1x8x128xf32> to vector<8x128xf32>
      %222 = arith.addf %221, %114 : vector<8x128xf32>
      %c0_87 = arith.constant 0 : index
      %c4_88 = arith.constant 4 : index
      %c0_89 = arith.constant 0 : index
      %c0_90 = arith.constant 0 : index
      %223 = vector.load %arg5[%c0_87, %c4_88, %c0_89, %c0_90] : memref<1x20x8x128xf32, #tpu.memory_space<vmem>>, vector<1x1x8x128xf32>
      %224 = vector.shape_cast %223 : vector<1x1x8x128xf32> to vector<8x128xf32>
      %225 = vector.shape_cast %222 : vector<8x128xf32> to vector<1x1x8x128xf32>
      tpu.vector_store %arg5[%c0_87, %c4_88, %c0_89, %c0_90], %225 {strides = array<i32>} : memref<1x20x8x128xf32, #tpu.memory_space<vmem>>, vector<1x1x8x128xf32>,
      %c0_91 = arith.constant 0 : index
      %c5 = arith.constant 5 : index
      %c0_92 = arith.constant 0 : index
      %c0_93 = arith.constant 0 : index
      %226 = vector.load %arg5[%c0_91, %c5, %c0_92, %c0_93] : memref<1x20x8x128xf32, #tpu.memory_space<vmem>>, vector<1x1x8x128xf32>
      %227 = vector.shape_cast %226 : vector<1x1x8x128xf32> to vector<8x128xf32>
      %228 = arith.addf %227, %129 : vector<8x128xf32>
      %c0_94 = arith.constant 0 : index
      %c5_95 = arith.constant 5 : index
      %c0_96 = arith.constant 0 : index
      %c0_97 = arith.constant 0 : index
      %229 = vector.load %arg5[%c0_94, %c5_95, %c0_96, %c0_97] : memref<1x20x8x128xf32, #tpu.memory_space<vmem>>, vector<1x1x8x128xf32>
      %230 = vector.shape_cast %229 : vector<1x1x8x128xf32> to vector<8x128xf32>
      %231 = vector.shape_cast %228 : vector<8x128xf32> to vector<1x1x8x128xf32>
      tpu.vector_store %arg5[%c0_94, %c5_95, %c0_96, %c0_97], %231 {strides = array<i32>} : memref<1x20x8x128xf32, #tpu.memory_space<vmem>>, vector<1x1x8x128xf32>,
      %c0_98 = arith.constant 0 : index
      %c6 = arith.constant 6 : index
      %c0_99 = arith.constant 0 : index
      %c0_100 = arith.constant 0 : index
      %232 = vector.load %arg5[%c0_98, %c6, %c0_99, %c0_100] : memref<1x20x8x128xf32, #tpu.memory_space<vmem>>, vector<1x1x8x128xf32>
      %233 = vector.shape_cast %232 : vector<1x1x8x128xf32> to vector<8x128xf32>
      %234 = arith.addf %233, %144 : vector<8x128xf32>
      %c0_101 = arith.constant 0 : index
      %c6_102 = arith.constant 6 : index
      %c0_103 = arith.constant 0 : index
      %c0_104 = arith.constant 0 : index
      %235 = vector.load %arg5[%c0_101, %c6_102, %c0_103, %c0_104] : memref<1x20x8x128xf32, #tpu.memory_space<vmem>>, vector<1x1x8x128xf32>
      %236 = vector.shape_cast %235 : vector<1x1x8x128xf32> to vector<8x128xf32>
      %237 = vector.shape_cast %234 : vector<8x128xf32> to vector<1x1x8x128xf32>
      tpu.vector_store %arg5[%c0_101, %c6_102, %c0_103, %c0_104], %237 {strides = array<i32>} : memref<1x20x8x128xf32, #tpu.memory_space<vmem>>, vector<1x1x8x128xf32>,
      %c0_105 = arith.constant 0 : index
      %c7 = arith.constant 7 : index
      %c0_106 = arith.constant 0 : index
      %c0_107 = arith.constant 0 : index
      %238 = vector.load %arg5[%c0_105, %c7, %c0_106, %c0_107] : memref<1x20x8x128xf32, #tpu.memory_space<vmem>>, vector<1x1x8x128xf32>
      %239 = vector.shape_cast %238 : vector<1x1x8x128xf32> to vector<8x128xf32>
      %240 = arith.addf %239, %159 : vector<8x128xf32>
      %c0_108 = arith.constant 0 : index
      %c7_109 = arith.constant 7 : index
      %c0_110 = arith.constant 0 : index
      %c0_111 = arith.constant 0 : index
      %241 = vector.load %arg5[%c0_108, %c7_109, %c0_110, %c0_111] : memref<1x20x8x128xf32, #tpu.memory_space<vmem>>, vector<1x1x8x128xf32>
      %242 = vector.shape_cast %241 : vector<1x1x8x128xf32> to vector<8x128xf32>
      %243 = vector.shape_cast %240 : vector<8x128xf32> to vector<1x1x8x128xf32>
      tpu.vector_store %arg5[%c0_108, %c7_109, %c0_110, %c0_111], %243 {strides = array<i32>} : memref<1x20x8x128xf32, #tpu.memory_space<vmem>>, vector<1x1x8x128xf32>,
      %c0_112 = arith.constant 0 : index
      %c8 = arith.constant 8 : index
      %c0_113 = arith.constant 0 : index
      %c0_114 = arith.constant 0 : index
      %244 = vector.load %arg5[%c0_112, %c8, %c0_113, %c0_114] : memref<1x20x8x128xf32, #tpu.memory_space<vmem>>, vector<1x1x8x128xf32>
      %245 = vector.shape_cast %244 : vector<1x1x8x128xf32> to vector<8x128xf32>
      %246 = arith.addf %245, %174 : vector<8x128xf32>
      %c0_115 = arith.constant 0 : index
      %c8_116 = arith.constant 8 : index
      %c0_117 = arith.constant 0 : index
      %c0_118 = arith.constant 0 : index
      %247 = vector.load %arg5[%c0_115, %c8_116, %c0_117, %c0_118] : memref<1x20x8x128xf32, #tpu.memory_space<vmem>>, vector<1x1x8x128xf32>
      %248 = vector.shape_cast %247 : vector<1x1x8x128xf32> to vector<8x128xf32>
      %249 = vector.shape_cast %246 : vector<8x128xf32> to vector<1x1x8x128xf32>
      tpu.vector_store %arg5[%c0_115, %c8_116, %c0_117, %c0_118], %249 {strides = array<i32>} : memref<1x20x8x128xf32, #tpu.memory_space<vmem>>, vector<1x1x8x128xf32>,
      %c0_119 = arith.constant 0 : index
      %c9 = arith.constant 9 : index
      %c0_120 = arith.constant 0 : index
      %c0_121 = arith.constant 0 : index
      %250 = vector.load %arg5[%c0_119, %c9, %c0_120, %c0_121] : memref<1x20x8x128xf32, #tpu.memory_space<vmem>>, vector<1x1x8x128xf32>
      %251 = vector.shape_cast %250 : vector<1x1x8x128xf32> to vector<8x128xf32>
      %252 = arith.addf %251, %189 : vector<8x128xf32>
      %c0_122 = arith.constant 0 : index
      %c9_123 = arith.constant 9 : index
      %c0_124 = arith.constant 0 : index
      %c0_125 = arith.constant 0 : index
      %253 = vector.load %arg5[%c0_122, %c9_123, %c0_124, %c0_125] : memref<1x20x8x128xf32, #tpu.memory_space<vmem>>, vector<1x1x8x128xf32>
      %254 = vector.shape_cast %253 : vector<1x1x8x128xf32> to vector<8x128xf32>
      %255 = vector.shape_cast %252 : vector<8x128xf32> to vector<1x1x8x128xf32>
      tpu.vector_store %arg5[%c0_122, %c9_123, %c0_124, %c0_125], %255 {strides = array<i32>} : memref<1x20x8x128xf32, #tpu.memory_space<vmem>>, vector<1x1x8x128xf32>,
      %c0_126 = arith.constant 0 : index
      %c10 = arith.constant 10 : index
      %c0_127 = arith.constant 0 : index
      %c0_128 = arith.constant 0 : index
      %256 = vector.load %arg5[%c0_126, %c10, %c0_127, %c0_128] : memref<1x20x8x128xf32, #tpu.memory_space<vmem>>, vector<1x1x8x128xf32>
      %257 = vector.shape_cast %256 : vector<1x1x8x128xf32> to vector<8x128xf32>
      %258 = arith.addf %257, %60 : vector<8x128xf32>
      %c0_129 = arith.constant 0 : index
      %c10_130 = arith.constant 10 : index
      %c0_131 = arith.constant 0 : index
      %c0_132 = arith.constant 0 : index
      %259 = vector.load %arg5[%c0_129, %c10_130, %c0_131, %c0_132] : memref<1x20x8x128xf32, #tpu.memory_space<vmem>>, vector<1x1x8x128xf32>
      %260 = vector.shape_cast %259 : vector<1x1x8x128xf32> to vector<8x128xf32>
      %261 = vector.shape_cast %258 : vector<8x128xf32> to vector<1x1x8x128xf32>
      tpu.vector_store %arg5[%c0_129, %c10_130, %c0_131, %c0_132], %261 {strides = array<i32>} : memref<1x20x8x128xf32, #tpu.memory_space<vmem>>, vector<1x1x8x128xf32>,
      %c0_133 = arith.constant 0 : index
      %c11 = arith.constant 11 : index
      %c0_134 = arith.constant 0 : index
      %c0_135 = arith.constant 0 : index
      %262 = vector.load %arg5[%c0_133, %c11, %c0_134, %c0_135] : memref<1x20x8x128xf32, #tpu.memory_space<vmem>>, vector<1x1x8x128xf32>
      %263 = vector.shape_cast %262 : vector<1x1x8x128xf32> to vector<8x128xf32>
      %264 = arith.addf %263, %75 : vector<8x128xf32>
      %c0_136 = arith.constant 0 : index
      %c11_137 = arith.constant 11 : index
      %c0_138 = arith.constant 0 : index
      %c0_139 = arith.constant 0 : index
      %265 = vector.load %arg5[%c0_136, %c11_137, %c0_138, %c0_139] : memref<1x20x8x128xf32, #tpu.memory_space<vmem>>, vector<1x1x8x128xf32>
      %266 = vector.shape_cast %265 : vector<1x1x8x128xf32> to vector<8x128xf32>
      %267 = vector.shape_cast %264 : vector<8x128xf32> to vector<1x1x8x128xf32>
      tpu.vector_store %arg5[%c0_136, %c11_137, %c0_138, %c0_139], %267 {strides = array<i32>} : memref<1x20x8x128xf32, #tpu.memory_space<vmem>>, vector<1x1x8x128xf32>,
      %c0_140 = arith.constant 0 : index
      %c12 = arith.constant 12 : index
      %c0_141 = arith.constant 0 : index
      %c0_142 = arith.constant 0 : index
      %268 = vector.load %arg5[%c0_140, %c12, %c0_141, %c0_142] : memref<1x20x8x128xf32, #tpu.memory_space<vmem>>, vector<1x1x8x128xf32>
      %269 = vector.shape_cast %268 : vector<1x1x8x128xf32> to vector<8x128xf32>
      %270 = arith.addf %269, %90 : vector<8x128xf32>
      %c0_143 = arith.constant 0 : index
      %c12_144 = arith.constant 12 : index
      %c0_145 = arith.constant 0 : index
      %c0_146 = arith.constant 0 : index
      %271 = vector.load %arg5[%c0_143, %c12_144, %c0_145, %c0_146] : memref<1x20x8x128xf32, #tpu.memory_space<vmem>>, vector<1x1x8x128xf32>
      %272 = vector.shape_cast %271 : vector<1x1x8x128xf32> to vector<8x128xf32>
      %273 = vector.shape_cast %270 : vector<8x128xf32> to vector<1x1x8x128xf32>
      tpu.vector_store %arg5[%c0_143, %c12_144, %c0_145, %c0_146], %273 {strides = array<i32>} : memref<1x20x8x128xf32, #tpu.memory_space<vmem>>, vector<1x1x8x128xf32>,
      %c0_147 = arith.constant 0 : index
      %c13 = arith.constant 13 : index
      %c0_148 = arith.constant 0 : index
      %c0_149 = arith.constant 0 : index
      %274 = vector.load %arg5[%c0_147, %c13, %c0_148, %c0_149] : memref<1x20x8x128xf32, #tpu.memory_space<vmem>>, vector<1x1x8x128xf32>
      %275 = vector.shape_cast %274 : vector<1x1x8x128xf32> to vector<8x128xf32>
      %276 = arith.addf %275, %105 : vector<8x128xf32>
      %c0_150 = arith.constant 0 : index
      %c13_151 = arith.constant 13 : index
      %c0_152 = arith.constant 0 : index
      %c0_153 = arith.constant 0 : index
      %277 = vector.load %arg5[%c0_150, %c13_151, %c0_152, %c0_153] : memref<1x20x8x128xf32, #tpu.memory_space<vmem>>, vector<1x1x8x128xf32>
      %278 = vector.shape_cast %277 : vector<1x1x8x128xf32> to vector<8x128xf32>
      %279 = vector.shape_cast %276 : vector<8x128xf32> to vector<1x1x8x128xf32>
      tpu.vector_store %arg5[%c0_150, %c13_151, %c0_152, %c0_153], %279 {strides = array<i32>} : memref<1x20x8x128xf32, #tpu.memory_space<vmem>>, vector<1x1x8x128xf32>,
      %c0_154 = arith.constant 0 : index
      %c14 = arith.constant 14 : index
      %c0_155 = arith.constant 0 : index
      %c0_156 = arith.constant 0 : index
      %280 = vector.load %arg5[%c0_154, %c14, %c0_155, %c0_156] : memref<1x20x8x128xf32, #tpu.memory_space<vmem>>, vector<1x1x8x128xf32>
      %281 = vector.shape_cast %280 : vector<1x1x8x128xf32> to vector<8x128xf32>
      %282 = arith.addf %281, %120 : vector<8x128xf32>
      %c0_157 = arith.constant 0 : index
      %c14_158 = arith.constant 14 : index
      %c0_159 = arith.constant 0 : index
      %c0_160 = arith.constant 0 : index
      %283 = vector.load %arg5[%c0_157, %c14_158, %c0_159, %c0_160] : memref<1x20x8x128xf32, #tpu.memory_space<vmem>>, vector<1x1x8x128xf32>
      %284 = vector.shape_cast %283 : vector<1x1x8x128xf32> to vector<8x128xf32>
      %285 = vector.shape_cast %282 : vector<8x128xf32> to vector<1x1x8x128xf32>
      tpu.vector_store %arg5[%c0_157, %c14_158, %c0_159, %c0_160], %285 {strides = array<i32>} : memref<1x20x8x128xf32, #tpu.memory_space<vmem>>, vector<1x1x8x128xf32>,
      %c0_161 = arith.constant 0 : index
      %c15 = arith.constant 15 : index
      %c0_162 = arith.constant 0 : index
      %c0_163 = arith.constant 0 : index
      %286 = vector.load %arg5[%c0_161, %c15, %c0_162, %c0_163] : memref<1x20x8x128xf32, #tpu.memory_space<vmem>>, vector<1x1x8x128xf32>
      %287 = vector.shape_cast %286 : vector<1x1x8x128xf32> to vector<8x128xf32>
      %288 = arith.addf %287, %135 : vector<8x128xf32>
      %c0_164 = arith.constant 0 : index
      %c15_165 = arith.constant 15 : index
      %c0_166 = arith.constant 0 : index
      %c0_167 = arith.constant 0 : index
      %289 = vector.load %arg5[%c0_164, %c15_165, %c0_166, %c0_167] : memref<1x20x8x128xf32, #tpu.memory_space<vmem>>, vector<1x1x8x128xf32>
      %290 = vector.shape_cast %289 : vector<1x1x8x128xf32> to vector<8x128xf32>
      %291 = vector.shape_cast %288 : vector<8x128xf32> to vector<1x1x8x128xf32>
      tpu.vector_store %arg5[%c0_164, %c15_165, %c0_166, %c0_167], %291 {strides = array<i32>} : memref<1x20x8x128xf32, #tpu.memory_space<vmem>>, vector<1x1x8x128xf32>,
      %c0_168 = arith.constant 0 : index
      %c16 = arith.constant 16 : index
      %c0_169 = arith.constant 0 : index
      %c0_170 = arith.constant 0 : index
      %292 = vector.load %arg5[%c0_168, %c16, %c0_169, %c0_170] : memref<1x20x8x128xf32, #tpu.memory_space<vmem>>, vector<1x1x8x128xf32>
      %293 = vector.shape_cast %292 : vector<1x1x8x128xf32> to vector<8x128xf32>
      %294 = arith.addf %293, %150 : vector<8x128xf32>
      %c0_171 = arith.constant 0 : index
      %c16_172 = arith.constant 16 : index
      %c0_173 = arith.constant 0 : index
      %c0_174 = arith.constant 0 : index
      %295 = vector.load %arg5[%c0_171, %c16_172, %c0_173, %c0_174] : memref<1x20x8x128xf32, #tpu.memory_space<vmem>>, vector<1x1x8x128xf32>
      %296 = vector.shape_cast %295 : vector<1x1x8x128xf32> to vector<8x128xf32>
      %297 = vector.shape_cast %294 : vector<8x128xf32> to vector<1x1x8x128xf32>
      tpu.vector_store %arg5[%c0_171, %c16_172, %c0_173, %c0_174], %297 {strides = array<i32>} : memref<1x20x8x128xf32, #tpu.memory_space<vmem>>, vector<1x1x8x128xf32>,
      %c0_175 = arith.constant 0 : index
      %c17 = arith.constant 17 : index
      %c0_176 = arith.constant 0 : index
      %c0_177 = arith.constant 0 : index
      %298 = vector.load %arg5[%c0_175, %c17, %c0_176, %c0_177] : memref<1x20x8x128xf32, #tpu.memory_space<vmem>>, vector<1x1x8x128xf32>
      %299 = vector.shape_cast %298 : vector<1x1x8x128xf32> to vector<8x128xf32>
      %300 = arith.addf %299, %165 : vector<8x128xf32>
      %c0_178 = arith.constant 0 : index
      %c17_179 = arith.constant 17 : index
      %c0_180 = arith.constant 0 : index
      %c0_181 = arith.constant 0 : index
      %301 = vector.load %arg5[%c0_178, %c17_179, %c0_180, %c0_181] : memref<1x20x8x128xf32, #tpu.memory_space<vmem>>, vector<1x1x8x128xf32>
      %302 = vector.shape_cast %301 : vector<1x1x8x128xf32> to vector<8x128xf32>
      %303 = vector.shape_cast %300 : vector<8x128xf32> to vector<1x1x8x128xf32>
      tpu.vector_store %arg5[%c0_178, %c17_179, %c0_180, %c0_181], %303 {strides = array<i32>} : memref<1x20x8x128xf32, #tpu.memory_space<vmem>>, vector<1x1x8x128xf32>,
      %c0_182 = arith.constant 0 : index
      %c18 = arith.constant 18 : index
      %c0_183 = arith.constant 0 : index
      %c0_184 = arith.constant 0 : index
      %304 = vector.load %arg5[%c0_182, %c18, %c0_183, %c0_184] : memref<1x20x8x128xf32, #tpu.memory_space<vmem>>, vector<1x1x8x128xf32>
      %305 = vector.shape_cast %304 : vector<1x1x8x128xf32> to vector<8x128xf32>
      %306 = arith.addf %305, %180 : vector<8x128xf32>
      %c0_185 = arith.constant 0 : index
      %c18_186 = arith.constant 18 : index
      %c0_187 = arith.constant 0 : index
      %c0_188 = arith.constant 0 : index
      %307 = vector.load %arg5[%c0_185, %c18_186, %c0_187, %c0_188] : memref<1x20x8x128xf32, #tpu.memory_space<vmem>>, vector<1x1x8x128xf32>
      %308 = vector.shape_cast %307 : vector<1x1x8x128xf32> to vector<8x128xf32>
      %309 = vector.shape_cast %306 : vector<8x128xf32> to vector<1x1x8x128xf32>
      tpu.vector_store %arg5[%c0_185, %c18_186, %c0_187, %c0_188], %309 {strides = array<i32>} : memref<1x20x8x128xf32, #tpu.memory_space<vmem>>, vector<1x1x8x128xf32>,
      %c0_189 = arith.constant 0 : index
      %c19 = arith.constant 19 : index
      %c0_190 = arith.constant 0 : index
      %c0_191 = arith.constant 0 : index
      %310 = vector.load %arg5[%c0_189, %c19, %c0_190, %c0_191] : memref<1x20x8x128xf32, #tpu.memory_space<vmem>>, vector<1x1x8x128xf32>
      %311 = vector.shape_cast %310 : vector<1x1x8x128xf32> to vector<8x128xf32>
      %312 = arith.addf %311, %195 : vector<8x128xf32>
      %c0_192 = arith.constant 0 : index
      %c19_193 = arith.constant 19 : index
      %c0_194 = arith.constant 0 : index
      %c0_195 = arith.constant 0 : index
      %313 = vector.load %arg5[%c0_192, %c19_193, %c0_194, %c0_195] : memref<1x20x8x128xf32, #tpu.memory_space<vmem>>, vector<1x1x8x128xf32>
      %314 = vector.shape_cast %313 : vector<1x1x8x128xf32> to vector<8x128xf32>
      %315 = vector.shape_cast %312 : vector<8x128xf32> to vector<1x1x8x128xf32>
      tpu.vector_store %arg5[%c0_192, %c19_193, %c0_194, %c0_195], %315 {strides = array<i32>} : memref<1x20x8x128xf32, #tpu.memory_space<vmem>>, vector<1x1x8x128xf32>,
    } else {
    }
    return
  }
  func.func @transform_0(%arg0: i32, %arg1: i32) -> (i32, i32) {
    %c1_i32 = arith.constant 1 : i32
    %0 = arith.muli %arg0, %c1_i32 : i32
    %1 = arith.addi %0, %arg1 : i32
    %c0_i32 = arith.constant 0 : i32
    %2 = arith.minsi %1, %c0_i32 : i32
    %c0_i32_0 = arith.constant 0 : i32
    %c0_i32_1 = arith.constant 0 : i32
    return %2, %c0_i32_0 : i32, i32
  }
  func.func @transform_1(%arg0: i32, %arg1: i32) -> (i32, i32) {
    %c1_i32 = arith.constant 1 : i32
    %0 = arith.muli %arg0, %c1_i32 : i32
    %1 = arith.addi %0, %arg1 : i32
    %c0_i32 = arith.constant 0 : i32
    %2 = arith.minsi %1, %c0_i32 : i32
    %c0_i32_0 = arith.constant 0 : i32
    %c0_i32_1 = arith.constant 0 : i32
    return %2, %c0_i32_0 : i32, i32
  }
  func.func @transform_2(%arg0: i32, %arg1: i32) -> (i32, i32) {
    %c1_i32 = arith.constant 1 : i32
    %0 = arith.muli %arg0, %c1_i32 : i32
    %1 = arith.addi %0, %arg1 : i32
    %c0_i32 = arith.constant 0 : i32
    %2 = arith.minsi %1, %c0_i32 : i32
    %c0_i32_0 = arith.constant 0 : i32
    %c0_i32_1 = arith.constant 0 : i32
    return %2, %c0_i32_0 : i32, i32
  }
  func.func @transform_3(%arg0: i32, %arg1: i32) -> (i32, i32, i32, i32) {
    %c0_i32 = arith.constant 0 : i32
    %c0_i32_0 = arith.constant 0 : i32
    %c0_i32_1 = arith.constant 0 : i32
    %c0_i32_2 = arith.constant 0 : i32
    return %arg0, %c0_i32, %c0_i32_0, %c0_i32_1 : i32, i32, i32, i32
  }
}

</mosaic_0001>

<llo_original>
// kernel: tpu_custom_call.1
$region0: #{tpu_custom_call.1}
  #allocation0 [shape = 'u32[]', space=smem, size = 0x4, offset = 0x4, fixed_abs, tag = 'smem constant byte address 0x4 - core index']
  #allocation1 [shape = 'u32[144,128]{1,0:T(1,128)}', space=vmem, size = 0x12000, scoped, tag = 'internal scratch']
  %s0 = inlined_call_operand.hbm [shape: f32[16,128], index: 0, kind: input, shape index: {}]
  %s1 = inlined_call_operand.hbm [shape: f32[16,128], index: 1, kind: input, shape index: {}]
  %s2 = inlined_call_operand.hbm [shape: f32[16,128], index: 2, kind: input, shape index: {}]
  %s3 = inlined_call_operand.hbm [shape: f32[2,20,8,128], index: 3, kind: output, shape index: {}]
  %s4 = sld [smem:[#allocation0]]
  $region65: #{tpu_custom_call.1} parent=0
    _
  %s6 = ssub.s32 1, %s4
  %s7 = scalar_select 0, %s6, %s4
  $region1: #{tpu_custom_call.1} parent=0
    #allocation2 [shape = 'u8[16384]{0}', space=vmem, size = 0x4000, scoped, tag = 'input window, operand 0']
    #allocation3 [shape = 's32[2]{0}', space=sflag, size = 0x8, scoped, tag = 'scoped memory for tpu_custom_call.1']
    #allocation4 [shape = 's32[2]{0}', space=sflag, size = 0x8, scoped, tag = 'scoped memory for tpu_custom_call.1']
    #allocation5 [shape = 'u8[16384]{0}', space=vmem, size = 0x4000, scoped, tag = 'input window, operand 1']
    #allocation6 [shape = 's32[2]{0}', space=sflag, size = 0x8, scoped, tag = 'scoped memory for tpu_custom_call.1']
    #allocation7 [shape = 'u8[16384]{0}', space=vmem, size = 0x4000, scoped, tag = 'input window, operand 2']
    #allocation8 [shape = 'u8[163840]{0}', space=vmem, size = 0x28000, scoped, tag = 'output window, operand 0']
    %8 = vsyncpa [#allocation3], 0
    %s9 = scalar_lea.sflag [#allocation3], 1
    %10 = vsyncpa %s9, 0
    %11 = vsyncpa [#allocation6], 0
    %s12 = scalar_lea.sflag [#allocation6], 1
    %13 = vsyncpa %s12, 0
    %14 = vsyncpa [#allocation4], 0
    %s15 = scalar_lea.sflag [#allocation4], 1
    %16 = vsyncpa %s15, 0
    loop: start=0, step=1, limit=4
    $region2: #{tpu_custom_call.1} parent=1 // loop_pre_header
      _
    $region3: #{tpu_custom_call.1} parent=1 // loop_header
      %s18 = sphi 0, %s22
      %p19 = scmp.ge.s32.totalorder %s18, 4
      %s25 = sphi 0, %s37
      %s26 = sphi 0, %s33
      %s27 = sphi 0, %s25
      %s28 = sphi 0, %s26
      %s29 = sphi 0, %s27
      %s30 = sphi 0, %s28
      %s46 = sphi 0, %s48
      %s49 = sphi 0, %s46
      %s50 = sphi 0, %s49
      %s66 = sphi 0, %s50
      %s78 = sphi 0, %s80
      %s81 = sphi 0, %s78
      %s82 = sphi 0, %s81
      %s98 = sphi 0, %s82
      %s110 = sphi 0, %s112
      %s113 = sphi 0, %s110
      %s114 = sphi 0, %s113
      %s130 = sphi 0, %s114
      %s136 = sphi 0, %s138
      %s139 = sphi 0, %s136
      %s140 = sphi 0, %s139
      %s156 = sphi 0, %s140
    $region4: #{tpu_custom_call.1} parent=1 // loop_header_branch
      %21 = sbr.rel (%p19) target = $region8
    $region5: #{tpu_custom_call.1} parent=1 // loop_body
      %s23 = ssub.s32 %s18, 1
      %s24 = ssub.s32 %s18, 2
      %s31 = sadd.s32 1, %s26
      %p32 = scmp.ge.s32.totalorder %s31, 1
      %s33 = scalar_select %p32, 0, %s31
      %s34 = sadd.s32 1, %s25
      %s35 = scalar_select %p32, %s34, %s25
      %p36 = scmp.ge.s32.totalorder %s35, 2
      %s37 = scalar_select %p36, 0, %s35
      %s38 = sadd.s32 %s25, %s26
      %p39 = scmp.lt.s32.totalorder %s38, 0
      %s40 = scalar_select %p39, %s38, 0
      %s41 = sadd.s32 %s37, %s33
      %p42 = scmp.lt.s32.totalorder %s41, 0
      %s43 = scalar_select %p42, %s41, 0
      %s44 = ssub.s32 %s40, %s43
      %p45 = scmp.eq.s32.totalorder %s44, 0
      %s47 = sadd.s32 %s46, 1
      %s48 = scalar_select %p45, %s46, %s47
      %p51 = pneg %p45
      %p52 = scmp.eq.s32.totalorder %s18, 1
      %p53 = por %p51, %p52
      %p54 = scmp.ne.s32.totalorder %s46, %s49
      %p55 = scmp.eq.s32.totalorder %s18, 0
      %p56 = por %p54, %p55
      %p57 = scmp.ne.s32.totalorder %s46, %s49
      %p58 = scmp.eq.s32.totalorder %s23, 1
      %p59 = por %p57, %p58
      %p60 = scmp.ne.s32.totalorder %s49, %s50
      %p61 = scmp.eq.s32.totalorder %s23, 0
      %p62 = por %p60, %p61
      %p63 = scmp.ne.s32.totalorder %s49, %s50
      %p64 = scmp.eq.s32.totalorder %s24, 1
      %p65 = por %p63, %p64
      %p67 = scmp.ne.s32.totalorder %s50, %s66
      %p68 = scmp.eq.s32.totalorder %s24, 0
      %p69 = por %p67, %p68
      %s70 = sadd.s32 %s25, %s26
      %p71 = scmp.lt.s32.totalorder %s70, 0
      %s72 = scalar_select %p71, %s70, 0
      %s73 = sadd.s32 %s37, %s33
      %p74 = scmp.lt.s32.totalorder %s73, 0
      %s75 = scalar_select %p74, %s73, 0
      %s76 = ssub.s32 %s72, %s75
      %p77 = scmp.eq.s32.totalorder %s76, 0
      %s79 = sadd.s32 %s78, 1
      %s80 = scalar_select %p77, %s78, %s79
      %p83 = pneg %p77
      %p84 = scmp.eq.s32.totalorder %s18, 1
      %p85 = por %p83, %p84
      %p86 = scmp.ne.s32.totalorder %s78, %s81
      %p87 = scmp.eq.s32.totalorder %s18, 0
      %p88 = por %p86, %p87
      %p89 = scmp.ne.s32.totalorder %s78, %s81
      %p90 = scmp.eq.s32.totalorder %s23, 1
      %p91 = por %p89, %p90
      %p92 = scmp.ne.s32.totalorder %s81, %s82
      %p93 = scmp.eq.s32.totalorder %s23, 0
      %p94 = por %p92, %p93
      %p95 = scmp.ne.s32.totalorder %s81, %s82
      %p96 = scmp.eq.s32.totalorder %s24, 1
      %p97 = por %p95, %p96
      %p99 = scmp.ne.s32.totalorder %s82, %s98
      %p100 = scmp.eq.s32.totalorder %s24, 0
      %p101 = por %p99, %p100
      %s102 = sadd.s32 %s25, %s26
      %p103 = scmp.lt.s32.totalorder %s102, 0
      %s104 = scalar_select %p103, %s102, 0
      %s105 = sadd.s32 %s37, %s33
      %p106 = scmp.lt.s32.totalorder %s105, 0
      %s107 = scalar_select %p106, %s105, 0
      %s108 = ssub.s32 %s104, %s107
      %p109 = scmp.eq.s32.totalorder %s108, 0
      %s111 = sadd.s32 %s110, 1
      %s112 = scalar_select %p109, %s110, %s111
      %p115 = pneg %p109
      %p116 = scmp.eq.s32.totalorder %s18, 1
      %p117 = por %p115, %p116
      %p118 = scmp.ne.s32.totalorder %s110, %s113
      %p119 = scmp.eq.s32.totalorder %s18, 0
      %p120 = por %p118, %p119
      %p121 = scmp.ne.s32.totalorder %s110, %s113
      %p122 = scmp.eq.s32.totalorder %s23, 1
      %p123 = por %p121, %p122
      %p124 = scmp.ne.s32.totalorder %s113, %s114
      %p125 = scmp.eq.s32.totalorder %s23, 0
      %p126 = por %p124, %p125
      %p127 = scmp.ne.s32.totalorder %s113, %s114
      %p128 = scmp.eq.s32.totalorder %s24, 1
      %p129 = por %p127, %p128
      %p131 = scmp.ne.s32.totalorder %s114, %s130
      %p132 = scmp.eq.s32.totalorder %s24, 0
      %p133 = por %p131, %p132
      %s134 = ssub.s32 %s25, %s37
      %p135 = scmp.eq.s32.totalorder %s134, 0
      %s137 = sadd.s32 %s136, 1
      %s138 = scalar_select %p135, %s136, %s137
      %p141 = pneg %p135
      %p142 = scmp.eq.s32.totalorder %s18, 1
      %p143 = por %p141, %p142
      %p144 = scmp.ne.s32.totalorder %s136, %s139
      %p145 = scmp.eq.s32.totalorder %s18, 0
      %p146 = por %p144, %p145
      %p147 = scmp.ne.s32.totalorder %s136, %s139
      %p148 = scmp.eq.s32.totalorder %s23, 1
      %p149 = por %p147, %p148
      %p150 = scmp.ne.s32.totalorder %s139, %s140
      %p151 = scmp.eq.s32.totalorder %s23, 0
      %p152 = por %p150, %p151
      %p153 = scmp.ne.s32.totalorder %s139, %s140
      %p154 = scmp.eq.s32.totalorder %s24, 1
      %p155 = por %p153, %p154
      %p157 = scmp.ne.s32.totalorder %s140, %s156
      %p158 = scmp.eq.s32.totalorder %s24, 0
      %p159 = por %p157, %p158
      %p160 = scmp.le.s32.totalorder 1, %s18
      %p161 = scmp.lt.s32.totalorder %s18, 3
      %p162 = pnand %p160, %p161
      %p163 = pneg %p162
      // Predicated region
      $region9: #{tpu_custom_call.1} parent=5 // pred_check
        _
      $region10: #{tpu_custom_call.1} parent=5 // pred_check_branch
        %165 = sbr.rel (%p162) target = $region12
      $region11: #{tpu_custom_call.1} parent=5 // pred_region
        %s166 = ssub.s32 %s18, 1
      $region12: #{tpu_custom_call.1} parent=5 // pred_fallthru
        _
      %p167 = scmp.lt.s32.totalorder %s18, 2
      // Predicated region
      $region13: #{tpu_custom_call.1} parent=5 // pred_check
        %p168 = pneg %p167
      $region14: #{tpu_custom_call.1} parent=5 // pred_check_branch
        %170 = sbr.rel (%p168) target = $region16
      $region15: #{tpu_custom_call.1} parent=5 // pred_region
        // Predicated region
        $region17: #{tpu_custom_call.1} parent=15 // pred_check
          %p171 = pneg %p56
        $region18: #{tpu_custom_call.1} parent=15 // pred_check_branch
          %173 = sbr.rel (%p171) target = $region20
        $region19: #{tpu_custom_call.1} parent=15 // pred_region
          %s174 = sand.u32 %s46, 1
          %s175 = scalar_lea.sflag [#allocation3], %s174
          %s176 = sand.u32 %s46, 1
          %s177 = smul.addr %s176, 16
          %s178 = scalar_lea.vmem [#allocation2], %s177
          %s179 = sadd.s32 %s25, %s26
          %p180 = scmp.lt.s32.totalorder %s179, 0
          %s181 = scalar_select %p180, %s179, 0
          %s182 = smul.u32 2, %s181
          %s184 = ssub.s32 256, 256
          %185 = vsyncadd %s175, %s184
          %s186 = smul.addr %s182, 128
          %s187 = scalar_lea.hbm %s0, %s186
          %s188 = sshll.u32 %s178, 4
          %s189 = int_to_ptr.vmem [resolvable:$true] %s188
          %194 = dma.hbm_to_vmem [thread:$0]  %s187, 256, %s189, %s175, 128, 128, 8
        $region20: #{tpu_custom_call.1} parent=15 // pred_fallthru
          _
        // Predicated region
        $region21: #{tpu_custom_call.1} parent=15 // pred_check
          %p195 = pneg %p88
        $region22: #{tpu_custom_call.1} parent=15 // pred_check_branch
          %197 = sbr.rel (%p195) target = $region24
        $region23: #{tpu_custom_call.1} parent=15 // pred_region
          %s198 = sand.u32 %s18, 1
          %s199 = scalar_lea.sflag [#allocation6], %s198
          %s200 = sand.u32 %s78, 1
          %s201 = smul.addr %s200, 16
          %s202 = scalar_lea.vmem [#allocation5], %s201
          %s203 = sadd.s32 %s25, %s26
          %p204 = scmp.lt.s32.totalorder %s203, 0
          %s205 = scalar_select %p204, %s203, 0
          %s206 = smul.u32 2, %s205
          %s208 = ssub.s32 256, 256
          %209 = vsyncadd %s199, %s208
          %s210 = smul.addr %s206, 128
          %s211 = scalar_lea.hbm %s1, %s210
          %s212 = sshll.u32 %s202, 4
          %s213 = int_to_ptr.vmem [resolvable:$true] %s212
          %218 = dma.hbm_to_vmem [thread:$0]  %s211, 256, %s213, %s199, 128, 128, 8
        $region24: #{tpu_custom_call.1} parent=15 // pred_fallthru
          _
        // Predicated region
        $region25: #{tpu_custom_call.1} parent=15 // pred_check
          %p219 = pneg %p120
        $region26: #{tpu_custom_call.1} parent=15 // pred_check_branch
          %221 = sbr.rel (%p219) target = $region28
        $region27: #{tpu_custom_call.1} parent=15 // pred_region
          %s222 = sand.u32 %s18, 1
          %s223 = scalar_lea.sflag [#allocation6], %s222
          %s224 = sand.u32 %s110, 1
          %s225 = smul.addr %s224, 16
          %s226 = scalar_lea.vmem [#allocation7], %s225
          %s227 = sadd.s32 %s25, %s26
          %p228 = scmp.lt.s32.totalorder %s227, 0
          %s229 = scalar_select %p228, %s227, 0
          %s230 = smul.u32 2, %s229
          %s232 = ssub.s32 256, 256
          %233 = vsyncadd %s223, %s232
          %s234 = smul.addr %s230, 128
          %s235 = scalar_lea.hbm %s2, %s234
          %s236 = sshll.u32 %s226, 4
          %s237 = int_to_ptr.vmem [resolvable:$true] %s236
          %242 = dma.hbm_to_vmem [thread:$0]  %s235, 256, %s237, %s223, 128, 128, 8
        $region28: #{tpu_custom_call.1} parent=15 // pred_fallthru
          _
      $region16: #{tpu_custom_call.1} parent=5 // pred_fallthru
        _
      %p243 = scmp.le.s32.totalorder 1, %s18
      %p244 = scmp.lt.s32.totalorder %s18, 3
      %p245 = pnand %p243, %p244
      %p246 = pneg %p245
      // Predicated region
      $region29: #{tpu_custom_call.1} parent=5 // pred_check
        _
      $region30: #{tpu_custom_call.1} parent=5 // pred_check_branch
        %248 = sbr.rel (%p245) target = $region32
      $region31: #{tpu_custom_call.1} parent=5 // pred_region
        %s249 = ssub.s32 %s18, 1
        %s250 = sand.u32 %s49, 1
        %s251 = scalar_lea.sflag [#allocation3], %s250
        %s252 = sand.u32 %s49, 1
        %s253 = smul.addr %s252, 16
        %s254 = scalar_lea.vmem [#allocation2], %s253
        // Predicated region
        $region33: #{tpu_custom_call.1} parent=31 // pred_check
          %p255 = pneg %p62
        $region34: #{tpu_custom_call.1} parent=31 // pred_check_branch
          %257 = sbr.rel (%p255) target = $region36
        $region35: #{tpu_custom_call.1} parent=31 // pred_region
          %258 = dma.done %s251, 256
        $region36: #{tpu_custom_call.1} parent=31 // pred_fallthru
          _
        %s259 = sand.u32 %s23, 1
        %s260 = scalar_lea.sflag [#allocation6], %s259
        %s261 = sand.u32 %s81, 1
        %s262 = smul.addr %s261, 16
        %s263 = scalar_lea.vmem [#allocation5], %s262
        // Predicated region
        $region37: #{tpu_custom_call.1} parent=31 // pred_check
          %p264 = pneg %p94
        $region38: #{tpu_custom_call.1} parent=31 // pred_check_branch
          %266 = sbr.rel (%p264) target = $region40
        $region39: #{tpu_custom_call.1} parent=31 // pred_region
          %267 = dma.done %s260, 256
        $region40: #{tpu_custom_call.1} parent=31 // pred_fallthru
          _
        %s268 = sand.u32 %s23, 1
        %s269 = scalar_lea.sflag [#allocation6], %s268
        %s270 = sand.u32 %s113, 1
        %s271 = smul.addr %s270, 16
        %s272 = scalar_lea.vmem [#allocation7], %s271
        // Predicated region
        $region41: #{tpu_custom_call.1} parent=31 // pred_check
          %p273 = pneg %p126
        $region42: #{tpu_custom_call.1} parent=31 // pred_check_branch
          %275 = sbr.rel (%p273) target = $region44
        $region43: #{tpu_custom_call.1} parent=31 // pred_region
          %276 = dma.done %s269, 256
        $region44: #{tpu_custom_call.1} parent=31 // pred_fallthru
          _
        %s277 = sand.u32 %s49, 1
        %s278 = scalar_lea.sflag [#allocation3], %s277
        %s279 = sand.u32 %s49, 1
        %s280 = smul.addr %s279, 16
        %s281 = scalar_lea.vmem [#allocation2], %s280
        %p282 = pneg %p62
        %p283 = pneg %p59
        %s284 = sand.u32 %s23, 1
        %s285 = scalar_lea.sflag [#allocation6], %s284
        %s286 = sand.u32 %s81, 1
        %s287 = smul.addr %s286, 16
        %s288 = scalar_lea.vmem [#allocation5], %s287
        %p289 = pneg %p94
        %p290 = pneg %p91
        %s291 = sand.u32 %s23, 1
        %s292 = scalar_lea.sflag [#allocation6], %s291
        %s293 = sand.u32 %s113, 1
        %s294 = smul.addr %s293, 16
        %s295 = scalar_lea.vmem [#allocation7], %s294
        %p296 = pneg %p126
        %p297 = pneg %p123
        %p298 = pneg %p152
        %p299 = pneg %p149
        %s300 = sand.u32 %s139, 1
        %s301 = scalar_lea.sflag [#allocation4], %s300
        %s302 = sand.u32 %s139, 1
        %s303 = smul.addr %s302, 160
        %s304 = scalar_lea.vmem [#allocation8], %s303
        %s305 = sadd.s32 %s27, %s28
        %p306 = scmp.lt.s32.totalorder %s305, 0
        %s307 = scalar_select %p306, %s305, 0
        %s308 = smul.u32 2, %s307
        %s309 = sadd.s32 %s27, %s28
        %p310 = scmp.lt.s32.totalorder %s309, 0
        %s311 = scalar_select %p310, %s309, 0
        %s312 = smul.u32 2, %s311
        %s313 = sadd.s32 %s27, %s28
        %p314 = scmp.lt.s32.totalorder %s313, 0
        %s315 = scalar_select %p314, %s313, 0
        %s316 = smul.u32 2, %s315
        %p317 = scmp.eq.s32.totalorder %s28, 0
        // Predicated region
        $region45: #{tpu_custom_call.1} parent=31 // pred_check
          %p318 = pneg %p317
        $region46: #{tpu_custom_call.1} parent=31 // pred_check_branch
          %320 = sbr.rel (%p318) target = $region48
        $region47: #{tpu_custom_call.1} parent=31 // pred_region
          %321 = vst [vmem:[%s304] sm:$0xff] 0.0
          %322 = vst [vmem:[%s304 + $0x8] sm:$0xff] 0.0
          %323 = vst [vmem:[%s304 + $0x10] sm:$0xff] 0.0
          %324 = vst [vmem:[%s304 + $0x18] sm:$0xff] 0.0
          %325 = vst [vmem:[%s304 + $0x20] sm:$0xff] 0.0
          %326 = vst [vmem:[%s304 + $0x28] sm:$0xff] 0.0
          %327 = vst [vmem:[%s304 + $0x30] sm:$0xff] 0.0
          %328 = vst [vmem:[%s304 + $0x38] sm:$0xff] 0.0
          %329 = vst [vmem:[%s304 + $0x40] sm:$0xff] 0.0
          %330 = vst [vmem:[%s304 + $0x48] sm:$0xff] 0.0
          %331 = vst [vmem:[%s304 + $0x50] sm:$0xff] 0.0
          %332 = vst [vmem:[%s304 + $0x58] sm:$0xff] 0.0
          %333 = vst [vmem:[%s304 + $0x60] sm:$0xff] 0.0
          %334 = vst [vmem:[%s304 + $0x68] sm:$0xff] 0.0
          %335 = vst [vmem:[%s304 + $0x70] sm:$0xff] 0.0
          %336 = vst [vmem:[%s304 + $0x78] sm:$0xff] 0.0
          %337 = vst [vmem:[%s304 + $0x80] sm:$0xff] 0.0
          %338 = vst [vmem:[%s304 + $0x88] sm:$0xff] 0.0
          %339 = vst [vmem:[%s304 + $0x90] sm:$0xff] 0.0
          %340 = vst [vmem:[%s304 + $0x98] sm:$0xff] 0.0
        $region48: #{tpu_custom_call.1} parent=31 // pred_fallthru
          _
        %s341 = sadd.s32 %s27, %s28
        %s342 = smul.u32 %s341, 16
        %s343 = ssub.s32 16, %s342
        %v344 = vlaneseq
        %v345 = vshrl.u32 %v344, 7
        %v346 = vadd.s32 %v345, 8
        %p347 = scmp.gt.s32.totalorder %s343, 0
        // Predicated region
        $region49: #{tpu_custom_call.1} parent=31 // pred_check
          %p348 = pneg %p347
        $region50: #{tpu_custom_call.1} parent=31 // pred_check_branch
          %350 = sbr.rel (%p348) target = $region52
        $region51: #{tpu_custom_call.1} parent=31 // pred_region
          %v351 = vld [vmem:[%s254] sm:$0xff]
          %v352 = vld [vmem:[%s254 + $0x8] sm:$0xff]
          %v353 = vld [vmem:[%s263] sm:$0xff]
          %v354 = vld [vmem:[%s263 + $0x8] sm:$0xff]
          %v355 = vld [vmem:[%s272] sm:$0xff]
          %v356 = vld [vmem:[%s272 + $0x8] sm:$0xff]
          %vm357 = vcmp.gt.f32.partialorder %v355, 0.0
          %vm358 = vcmp.gt.f32.partialorder %v356, 0.0
          %s359 = ssub.s32 %s343, 0
          %v360 = vstv %s359
          %vm361 = vcmp.lt.s32.totalorder %v345, %v360
          %vm362 = vcmp.lt.s32.totalorder %v346, %v360
          %vm363 = vmand %vm357, %vm361
          %vm364 = vmand %vm358, %vm362
          %v365 = vand.u32 2147483647, %v351
          %v366 = vand.u32 2147483647, %v352
          %v367 = vsub.f32 0.0, %v365
          %v368 = vsub.f32 0.0, %v366
          %v369 = vmul.f32 %v367, 1.442695
          %v370 = vpow.pop %v369
          %v371 = vmul.f32 %v368, 1.442695
          %v372 = vpow.pop %v371
          %v373 = vadd.f32 %v370, 1.0
          %v374 = vadd.f32 %v372, 1.0
          %v375 = vrcp.pop %v373
          %v376 = vmul.f32 1.0, %v375
          %v377 = vrcp.pop %v374
          %v378 = vmul.f32 1.0, %v377
          %vm379 = vcmp.ge.f32.partialorder %v351, 0.0
          %vm380 = vcmp.ge.f32.partialorder %v352, 0.0
          %v381 = vmul.f32 %v370, %v376
          %v382 = vmul.f32 %v372, %v378
          %v383 = vsel %vm379, %v376, %v381
          %v384 = vsel %vm380, %v378, %v382
          %v385 = vsub.f32 %v383, %v353
          %v386 = vsub.f32 %v384, %v354
          %v387 = vand.u32 2147483647, %v385
          %v388 = vand.u32 2147483647, %v386
          %v389 = vmax.f32 %v351, 0.0
          %v390 = vmax.f32 %v352, 0.0
          %v391 = vmul.f32 %v351, %v353
          %v392 = vmul.f32 %v352, %v354
          %v393 = vsub.f32 %v389, %v391
          %v394 = vsub.f32 %v390, %v392
          %v395 = vadd.f32 %v370, 1.0
          %v396 = vlog2.pop %v395
          %v397 = vmul.f32 %v396, 0.6931472
          %v398 = vmul.f32 -0.5, %v370
          %v399 = vadd.f32 %v398, 1.0
          %v400 = vmul.f32 %v399, %v370
          %v401 = vand.u32 2147483647, %v370
          %vm402 = vcmp.lt.f32.partialorder %v401, 0.0004427343
          %v403 = vsel %vm402, %v400, %v397
          %v404 = vadd.f32 %v372, 1.0
          %v405 = vlog2.pop %v404
          %v406 = vmul.f32 %v405, 0.6931472
          %v407 = vmul.f32 -0.5, %v372
          %v408 = vadd.f32 %v407, 1.0
          %v409 = vmul.f32 %v408, %v372
          %v410 = vand.u32 2147483647, %v372
          %vm411 = vcmp.lt.f32.partialorder %v410, 0.0004427343
          %v412 = vsel %vm411, %v409, %v406
          %v413 = vadd.f32 %v393, %v403
          %v414 = vadd.f32 %v394, %v412
          %v415 = vsel %vm363, %v387, -1.0
          %v416 = vsel %vm364, %v388, -1.0
          %v417 = vsel %vm363, 1.0, 0.0
          %v418 = vsel %vm364, 1.0, 0.0
          %v419 = vadd.f32 %v417, %v418
          %v420 = vadd.f32 %v419, 0.0
          %v421 = vsel %vm363, %v413, 0.0
          %v422 = vsel %vm364, %v414, 0.0
          %v423 = vadd.f32 %v421, %v422
          %v424 = vadd.f32 %v423, 0.0
          %vm425 = vcmp.ge.f32.partialorder %v415, 0.1
          %vm426 = vcmp.ge.f32.partialorder %v416, 0.1
          %v427 = vsel %vm425, 1.0, 0.0
          %v428 = vsel %vm426, 1.0, 0.0
          %v429 = vadd.f32 %v427, %v428
          %v430 = vadd.f32 %v429, 0.0
          %v431 = vsel %vm425, %v413, 0.0
          %v432 = vsel %vm426, %v414, 0.0
          %v433 = vadd.f32 %v431, %v432
          %v434 = vadd.f32 %v433, 0.0
          %vm435 = vcmp.ge.f32.partialorder %v415, 0.2
          %vm436 = vcmp.ge.f32.partialorder %v416, 0.2
          %v437 = vsel %vm435, 1.0, 0.0
          %v438 = vsel %vm436, 1.0, 0.0
          %v439 = vadd.f32 %v437, %v438
          %v440 = vadd.f32 %v439, 0.0
          %v441 = vsel %vm435, %v413, 0.0
          %v442 = vsel %vm436, %v414, 0.0
          %v443 = vadd.f32 %v441, %v442
          %v444 = vadd.f32 %v443, 0.0
          %vm445 = vcmp.ge.f32.partialorder %v415, 0.3
          %vm446 = vcmp.ge.f32.partialorder %v416, 0.3
          %v447 = vsel %vm445, 1.0, 0.0
          %v448 = vsel %vm446, 1.0, 0.0
          %v449 = vadd.f32 %v447, %v448
          %v450 = vadd.f32 %v449, 0.0
          %v451 = vsel %vm445, %v413, 0.0
          %v452 = vsel %vm446, %v414, 0.0
          %v453 = vadd.f32 %v451, %v452
          %v454 = vadd.f32 %v453, 0.0
          %vm455 = vcmp.ge.f32.partialorder %v415, 0.4
          %vm456 = vcmp.ge.f32.partialorder %v416, 0.4
          %v457 = vsel %vm455, 1.0, 0.0
          %v458 = vsel %vm456, 1.0, 0.0
          %v459 = vadd.f32 %v457, %v458
          %v460 = vadd.f32 %v459, 0.0
          %v461 = vsel %vm455, %v413, 0.0
          %v462 = vsel %vm456, %v414, 0.0
          %v463 = vadd.f32 %v461, %v462
          %v464 = vadd.f32 %v463, 0.0
          %vm465 = vcmp.ge.f32.partialorder %v415, 0.5
          %vm466 = vcmp.ge.f32.partialorder %v416, 0.5
          %v467 = vsel %vm465, 1.0, 0.0
          %v468 = vsel %vm466, 1.0, 0.0
          %v469 = vadd.f32 %v467, %v468
          %v470 = vadd.f32 %v469, 0.0
          %v471 = vsel %vm465, %v413, 0.0
          %v472 = vsel %vm466, %v414, 0.0
          %v473 = vadd.f32 %v471, %v472
          %v474 = vadd.f32 %v473, 0.0
          %vm475 = vcmp.ge.f32.partialorder %v415, 0.6
          %vm476 = vcmp.ge.f32.partialorder %v416, 0.6
          %v477 = vsel %vm475, 1.0, 0.0
          %v478 = vsel %vm476, 1.0, 0.0
          %v479 = vadd.f32 %v477, %v478
          %v480 = vadd.f32 %v479, 0.0
          %v481 = vsel %vm475, %v413, 0.0
          %v482 = vsel %vm476, %v414, 0.0
          %v483 = vadd.f32 %v481, %v482
          %v484 = vadd.f32 %v483, 0.0
          %vm485 = vcmp.ge.f32.partialorder %v415, 0.7
          %vm486 = vcmp.ge.f32.partialorder %v416, 0.7
          %v487 = vsel %vm485, 1.0, 0.0
          %v488 = vsel %vm486, 1.0, 0.0
          %v489 = vadd.f32 %v487, %v488
          %v490 = vadd.f32 %v489, 0.0
          %v491 = vsel %vm485, %v413, 0.0
          %v492 = vsel %vm486, %v414, 0.0
          %v493 = vadd.f32 %v491, %v492
          %v494 = vadd.f32 %v493, 0.0
          %vm495 = vcmp.ge.f32.partialorder %v415, 0.8
          %vm496 = vcmp.ge.f32.partialorder %v416, 0.8
          %v497 = vsel %vm495, 1.0, 0.0
          %v498 = vsel %vm496, 1.0, 0.0
          %v499 = vadd.f32 %v497, %v498
          %v500 = vadd.f32 %v499, 0.0
          %v501 = vsel %vm495, %v413, 0.0
          %v502 = vsel %vm496, %v414, 0.0
          %v503 = vadd.f32 %v501, %v502
          %v504 = vadd.f32 %v503, 0.0
          %vm505 = vcmp.ge.f32.partialorder %v415, 0.9
          %vm506 = vcmp.ge.f32.partialorder %v416, 0.9
          %v507 = vsel %vm505, 1.0, 0.0
          %v508 = vsel %vm506, 1.0, 0.0
          %v509 = vadd.f32 %v507, %v508
          %v510 = vadd.f32 %v509, 0.0
          %v511 = vsel %vm505, %v413, 0.0
          %v512 = vsel %vm506, %v414, 0.0
          %v513 = vadd.f32 %v511, %v512
          %v514 = vadd.f32 %v513, 0.0
          %v515 = vld [vmem:[%s304] sm:$0xff]
          %v516 = vadd.f32 %v515, %v420
          %517 = vst [vmem:[%s304] sm:$0xff] %v516
          %s518 = scalar_lea.vmem %s304, 8 [#allocation8]
          %v519 = vld [vmem:[%s518] sm:$0xff]
          %v520 = vadd.f32 %v519, %v430
          %521 = vst [vmem:[%s518] sm:$0xff] %v520
          %s522 = scalar_lea.vmem %s304, 16 [#allocation8]
          %v523 = vld [vmem:[%s522] sm:$0xff]
          %v524 = vadd.f32 %v523, %v440
          %525 = vst [vmem:[%s522] sm:$0xff] %v524
          %s526 = scalar_lea.vmem %s304, 24 [#allocation8]
          %v527 = vld [vmem:[%s526] sm:$0xff]
          %v528 = vadd.f32 %v527, %v450
          %529 = vst [vmem:[%s526] sm:$0xff] %v528
          %s530 = scalar_lea.vmem %s304, 32 [#allocation8]
          %v531 = vld [vmem:[%s530] sm:$0xff]
          %v532 = vadd.f32 %v531, %v460
          %533 = vst [vmem:[%s530] sm:$0xff] %v532
          %s534 = scalar_lea.vmem %s304, 40 [#allocation8]
          %v535 = vld [vmem:[%s534] sm:$0xff]
          %v536 = vadd.f32 %v535, %v470
          %537 = vst [vmem:[%s534] sm:$0xff] %v536
          %s538 = scalar_lea.vmem %s304, 48 [#allocation8]
          %v539 = vld [vmem:[%s538] sm:$0xff]
          %v540 = vadd.f32 %v539, %v480
          %541 = vst [vmem:[%s538] sm:$0xff] %v540
          %s542 = scalar_lea.vmem %s304, 56 [#allocation8]
          %v543 = vld [vmem:[%s542] sm:$0xff]
          %v544 = vadd.f32 %v543, %v490
          %545 = vst [vmem:[%s542] sm:$0xff] %v544
          %s546 = scalar_lea.vmem %s304, 64 [#allocation8]
          %v547 = vld [vmem:[%s546] sm:$0xff]
          %v548 = vadd.f32 %v547, %v500
          %549 = vst [vmem:[%s546] sm:$0xff] %v548
          %s550 = scalar_lea.vmem %s304, 72 [#allocation8]
          %v551 = vld [vmem:[%s550] sm:$0xff]
          %v552 = vadd.f32 %v551, %v510
          %553 = vst [vmem:[%s550] sm:$0xff] %v552
          %s554 = scalar_lea.vmem %s304, 80 [#allocation8]
          %v555 = vld [vmem:[%s554] sm:$0xff]
          %v556 = vadd.f32 %v555, %v424
          %557 = vst [vmem:[%s554] sm:$0xff] %v556
          %s558 = scalar_lea.vmem %s304, 88 [#allocation8]
          %v559 = vld [vmem:[%s558] sm:$0xff]
          %v560 = vadd.f32 %v559, %v434
          %561 = vst [vmem:[%s558] sm:$0xff] %v560
          %s562 = scalar_lea.vmem %s304, 96 [#allocation8]
          %v563 = vld [vmem:[%s562] sm:$0xff]
          %v564 = vadd.f32 %v563, %v444
          %565 = vst [vmem:[%s562] sm:$0xff] %v564
          %s566 = scalar_lea.vmem %s304, 104 [#allocation8]
          %v567 = vld [vmem:[%s566] sm:$0xff]
          %v568 = vadd.f32 %v567, %v454
          %569 = vst [vmem:[%s566] sm:$0xff] %v568
          %s570 = scalar_lea.vmem %s304, 112 [#allocation8]
          %v571 = vld [vmem:[%s570] sm:$0xff]
          %v572 = vadd.f32 %v571, %v464
          %573 = vst [vmem:[%s570] sm:$0xff] %v572
          %s574 = scalar_lea.vmem %s304, 120 [#allocation8]
          %v575 = vld [vmem:[%s574] sm:$0xff]
          %v576 = vadd.f32 %v575, %v474
          %577 = vst [vmem:[%s574] sm:$0xff] %v576
          %s578 = scalar_lea.vmem %s304, 128 [#allocation8]
          %v579 = vld [vmem:[%s578] sm:$0xff]
          %v580 = vadd.f32 %v579, %v484
          %581 = vst [vmem:[%s578] sm:$0xff] %v580
          %s582 = scalar_lea.vmem %s304, 136 [#allocation8]
          %v583 = vld [vmem:[%s582] sm:$0xff]
          %v584 = vadd.f32 %v583, %v494
          %585 = vst [vmem:[%s582] sm:$0xff] %v584
          %s586 = scalar_lea.vmem %s304, 144 [#allocation8]
          %v587 = vld [vmem:[%s586] sm:$0xff]
          %v588 = vadd.f32 %v587, %v504
          %589 = vst [vmem:[%s586] sm:$0xff] %v588
          %s590 = scalar_lea.vmem %s304, 152 [#allocation8]
          %v591 = vld [vmem:[%s590] sm:$0xff]
          %v592 = vadd.f32 %v591, %v514
          %593 = vst [vmem:[%s590] sm:$0xff] %v592
        $region52: #{tpu_custom_call.1} parent=31 // pred_fallthru
          _
        %s594 = sand.u32 %s139, 1
        %s595 = scalar_lea.sflag [#allocation4], %s594
        %s596 = sand.u32 %s139, 1
        %s597 = smul.addr %s596, 160
        %s598 = scalar_lea.vmem [#allocation8], %s597
        // Predicated region
        $region53: #{tpu_custom_call.1} parent=31 // pred_check
          %p599 = pneg %p149
        $region54: #{tpu_custom_call.1} parent=31 // pred_check_branch
          %601 = sbr.rel (%p599) target = $region56
        $region55: #{tpu_custom_call.1} parent=31 // pred_region
          %s603 = ssub.s32 2560, 2560
          %604 = vsyncadd %s595, %s603
          %s605 = smul.addr %s27, 20
          %s606 = smul.addr %s605, 128
          %s607 = scalar_lea.hbm %s3, %s606
          %s608 = sshll.u32 %s598, 4
          %s609 = int_to_ptr.vmem [resolvable:$true] %s608
          %614 = dma.vmem_to_hbm [thread:$0]  %s609, 2560, %s607, %s595, 128, 128, 8
        $region56: #{tpu_custom_call.1} parent=31 // pred_fallthru
          _
      $region32: #{tpu_custom_call.1} parent=5 // pred_fallthru
        _
      %p615 = scmp.le.s32.totalorder 2, %s18
      // Predicated region
      $region57: #{tpu_custom_call.1} parent=5 // pred_check
        %p616 = pneg %p615
      $region58: #{tpu_custom_call.1} parent=5 // pred_check_branch
        %618 = sbr.rel (%p616) target = $region60
      $region59: #{tpu_custom_call.1} parent=5 // pred_region
        %s619 = ssub.s32 %s18, 2
        // Predicated region
        $region61: #{tpu_custom_call.1} parent=59 // pred_check
          %p620 = pneg %p155
        $region62: #{tpu_custom_call.1} parent=59 // pred_check_branch
          %622 = sbr.rel (%p620) target = $region64
        $region63: #{tpu_custom_call.1} parent=59 // pred_region
          %s623 = sand.u32 %s140, 1
          %s624 = scalar_lea.sflag [#allocation4], %s623
          %s625 = sand.u32 %s140, 1
          %s626 = smul.addr %s625, 160
          %s627 = scalar_lea.vmem [#allocation8], %s626
          %628 = dma.done %s624, 2560
        $region64: #{tpu_custom_call.1} parent=59 // pred_fallthru
          _
      $region60: #{tpu_custom_call.1} parent=5 // pred_fallthru
        _
    $region6: #{tpu_custom_call.1} parent=1 // loop_footer
      %s22 = sadd.s32 1, %s18
    $region7: #{tpu_custom_call.1} parent=1 // loop_footer_branch
      %17 = sbr.rel target = $region3
    $region8: #{tpu_custom_call.1} parent=1 // loop_exit
      _
    %629 = vsyncpa [#allocation3], 1
    %s630 = scalar_lea.sflag [#allocation3], 1
    %631 = vsyncpa %s630, 1
    %632 = vsyncpa [#allocation6], 1
    %s633 = scalar_lea.sflag [#allocation6], 1
    %634 = vsyncpa %s633, 1
    %635 = vsyncpa [#allocation4], 1
    %s636 = scalar_lea.sflag [#allocation4], 1
    %637 = vsyncpa %s636, 1

</llo_original>
